<compile_context>
chip_gen: v7x
topology: tpu7x:2x2x1
jax: 0.10.0
libtpu: 0.0.40
codegen_flags: <defaults>
</compile_context>

<pallas_src>
import numpy as np
import jax
import jax.numpy as jnp
from jax.experimental import pallas as pl
from jax.experimental.pallas import tpu as pltpu

D_MODEL = 48
NUM_HEADS = 3
D_K = D_MODEL // NUM_HEADS  # 16


def _cross_attn_kernel(xq_ref, xk_ref, xv_ref,
                       wq_ref, bq_ref, wk_ref, bk_ref,
                       wv_ref, bv_ref, wh_ref, bh_ref,
                       h_ref, a_ref):
    TB, Sq, D = xq_ref.shape
    Sk = xk_ref.shape[1]

    # Flatten (TB, S, D) -> (TB*S, D): leading-dim-only reshape (free) so each
    # projection is one matmul over every row of the batch block.
    xq = xq_ref[...].reshape(TB * Sq, D)
    xk = xk_ref[...].reshape(TB * Sk, D)
    xv = xv_ref[...].reshape(TB * Sk, D)

    # Output accumulator initialized from the broadcast bias (saves a zero-init
    # pass + a trailing full-width add).  Hoisted out of the head loop.
    out = jnp.broadcast_to(bh_ref[...], (TB * Sq, D))

    # Static head unroll.  Head slicing lives in the pre-sliced weights
    # (leading-dim ref index, free): no 16-lane activation extracts, no stack.
    for h in range(NUM_HEADS):
        # Wq/bq already carry the 1/sqrt(d_k) attention scale.
        q = jnp.dot(xq, wq_ref[h], preferred_element_type=jnp.float32) + bq_ref[h]
        k = jnp.dot(xk, wk_ref[h], preferred_element_type=jnp.float32) + bk_ref[h]
        v = jnp.dot(xv, wv_ref[h], preferred_element_type=jnp.float32) + bv_ref[h]
        qh = q.reshape(TB, Sq, D_K)     # leading split: free
        kh = k.reshape(TB, Sk, D_K)
        vh = v.reshape(TB, Sk, D_K)

        # Scores + softmax over keys (exact divide keeps the 1e-5 tolerance).
        s = jnp.einsum("bqd,bkd->bqk", qh, kh,
                       preferred_element_type=jnp.float32)      # (TB, Sq, Sk)
        s = s - jnp.max(s, axis=-1, keepdims=True)
        e = jnp.exp(s)
        attn = e / jnp.sum(e, axis=-1, keepdims=True)

        # Store this head's slice of the attention map for the whole block.
        a_ref[:, pl.ds(h, 1), :, :] = attn[:, None, :, :]

        # Output projection accumulated per head: out += (A_h @ V_h) @ Wh_rows_h
        # (avoids concatenating 16-wide head slices entirely).
        ctx = jnp.einsum("bqk,bkd->bqd", attn, vh,
                         preferred_element_type=jnp.float32)    # (TB, Sq, D_K)
        out = out + jnp.dot(ctx.reshape(TB * Sq, D_K), wh_ref[h],
                            preferred_element_type=jnp.float32)

    h_ref[...] = out.reshape(TB, Sq, D)


def _round_up(x, m):
    return (x + m - 1) // m * m


def _pick_block_b(B, Sq, Sk, max_block_b, vmem_budget_bytes):
    """Batch elements per grid step, derived from a VMEM budget.

    Accounts for double-buffered pipeline blocks + a rough allowance for
    in-kernel temporaries (all f32, lane-padded to 128).  Capped by
    `max_block_b`, by B, and by ceil(B/2) so the grid keeps >= 2 steps and
    both v7x TensorCores receive work.
    """
    lane, f32 = 128, 4
    d_pad = _round_up(D_MODEL, lane)
    io = (Sq * d_pad                              # Xq block
          + 2 * Sk * d_pad                        # Xk, Xv blocks
          + Sq * d_pad                            # H out block
          + NUM_HEADS * Sq * _round_up(Sk, lane)) # A out block
    tmp = (3 * max(Sq, Sk) * _round_up(D_K, lane)   # q/k/v (one head live)
           + 3 * Sq * _round_up(Sk, lane)           # scores / exp / attn
           + 2 * Sq * d_pad)                        # ctx + output accumulator
    per_elem = f32 * (2 * io + tmp)
    tb = max(1, min(max_block_b, int(vmem_budget_bytes) // per_elem, B))
    if B >= 2:
        tb = min(tb, (B + 1) // 2)   # ensure >= 2 grid steps
    return tb


def cross_attention(xq, xk, xv, params, *, max_block_b=128,
                    vmem_budget_bytes=8 * 1024 * 1024):
    """xq: (B, Sq, D), xk/xv: (B, Sk, D). Returns (H, A)."""
    B, Sq, D = xq.shape
    Sk = xk.shape[1]
    assert D == D_MODEL

    tb = _pick_block_b(B, Sq, Sk, max_block_b, vmem_budget_bytes)
    n_blocks = -(-B // tb)
    b_pad = n_blocks * tb
    if b_pad != B:
        # Pad the batch (zeros -> finite uniform attention in padded rows),
        # slice the outputs back below.  Avoids tb=1 fallback for prime B.
        pad = b_pad - B
        xq = jnp.pad(xq, ((0, pad), (0, 0), (0, 0)))
        xk = jnp.pad(xk, ((0, pad), (0, 0), (0, 0)))
        xv = jnp.pad(xv, ((0, pad), (0, 0), (0, 0)))

    wq, bq, wk, bk, wv, bv, wh, bh = params
    scale = np.float32(1.0 / np.sqrt(D_K))

    # PyTorch (out, in) weights -> per-head (H, in, d_k) stacks, transposed once
    # in the wrapper; the 1/sqrt(d_k) scale is folded into Wq / bq.
    def per_head_in(w):
        return w.T.reshape(D_MODEL, NUM_HEADS, D_K).transpose(1, 0, 2)

    wq_h = per_head_in(wq * scale)
    wk_h = per_head_in(wk)
    wv_h = per_head_in(wv)
    bq_h = (bq * scale).reshape(NUM_HEADS, 1, D_K)
    bk_h = bk.reshape(NUM_HEADS, 1, D_K)
    bv_h = bv.reshape(NUM_HEADS, 1, D_K)
    wh_h = wh.T.reshape(NUM_HEADS, D_K, D_MODEL)   # rows of Wh^T, per head
    bh2 = bh.reshape(1, D_MODEL)

    # Constant index maps: weight/bias tiles are DMA'd once and reused.
    head_w_spec = pl.BlockSpec((NUM_HEADS, D_MODEL, D_K), lambda b: (0, 0, 0))
    head_b_spec = pl.BlockSpec((NUM_HEADS, 1, D_K), lambda b: (0, 0, 0))
    wh_spec = pl.BlockSpec((NUM_HEADS, D_K, D_MODEL), lambda b: (0, 0, 0))
    bh_spec = pl.BlockSpec((1, D_MODEL), lambda b: (0, 0))

    h_out, a_out = pl.pallas_call(
        _cross_attn_kernel,
        grid=(n_blocks,),
        in_specs=[
            pl.BlockSpec((tb, Sq, D_MODEL), lambda b: (b, 0, 0)),   # Xq
            pl.BlockSpec((tb, Sk, D_MODEL), lambda b: (b, 0, 0)),   # Xk
            pl.BlockSpec((tb, Sk, D_MODEL), lambda b: (b, 0, 0)),   # Xv
            head_w_spec, head_b_spec,                               # Wq, bq (pre-scaled)
            head_w_spec, head_b_spec,                               # Wk, bk
            head_w_spec, head_b_spec,                               # Wv, bv
            wh_spec, bh_spec,                                       # Wh, bh
        ],
        out_specs=[
            pl.BlockSpec((tb, Sq, D_MODEL), lambda b: (b, 0, 0)),
            pl.BlockSpec((tb, NUM_HEADS, Sq, Sk), lambda b: (b, 0, 0, 0)),
        ],
        out_shape=(
            jax.ShapeDtypeStruct((b_pad, Sq, D_MODEL), jnp.float32),
            jax.ShapeDtypeStruct((b_pad, NUM_HEADS, Sq, Sk), jnp.float32),
        ),
        compiler_params=pltpu.CompilerParams(
            dimension_semantics=("parallel",),        # batch blocks across TCs
            vmem_limit_bytes=32 * 1024 * 1024),
    )(xq, xk, xv, wq_h, bq_h, wk_h, bk_h, wv_h, bv_h, wh_h, bh2)

    if b_pad != B:
        h_out = h_out[:B]
        a_out = a_out[:B]
    return h_out, a_out


def _init_params(key):
    """Deterministic nn.Linear-style init: U(-1/sqrt(in), 1/sqrt(in))."""
    keys = jax.random.split(key, 8)
    bound = 1.0 / np.sqrt(D_MODEL)

    def lin(kw, kb):
        w = jax.random.uniform(kw, (D_MODEL, D_MODEL), jnp.float32, -bound, bound)
        b = jax.random.uniform(kb, (D_MODEL,), jnp.float32, -bound, bound)
        return w, b

    wq, bq = lin(keys[0], keys[1])
    wk, bk = lin(keys[2], keys[3])
    wv, bv = lin(keys[4], keys[5])
    wh, bh = lin(keys[6], keys[7])
    return (wq, bq, wk, bk, wv, bv, wh, bh)


def _reference(xq, xk, xv, params):
    """Plain-JAX reference mirroring the PyTorch forward."""
    wq, bq, wk, bk, wv, bv, wh, bh = params
    B = xq.shape[0]

    def split(x):
        return x.reshape(B, -1, NUM_HEADS, D_K).transpose(0, 2, 1, 3)

    Q = split(xq @ wq.T + bq)
    K = split(xk @ wk.T + bk)
    V = split(xv @ wv.T + bv)
    scores = jnp.einsum("bhqd,bhkd->bhqk", Q / np.sqrt(D_K), K)
    A = jax.nn.softmax(scores, axis=-1)
    ctx = jnp.einsum("bhqk,bhkd->bhqd", A, V)
    H_cat = ctx.transpose(0, 2, 1, 3).reshape(B, -1, D_MODEL)
    return H_cat @ wh.T + bh, A


if __name__ == "__main__":
    key = jax.random.PRNGKey(0)
    kp, kq, kk, kv = jax.random.split(key, 4)
    params = _init_params(kp)

    # Case 1: nominal small shapes (B=2 -> tb=1, grid=2: both v7x TCs used).
    B, Sq, Sk = 2, 8, 8
    xq = jax.random.normal(kq, (B, Sq, D_MODEL), jnp.float32)
    xk = jax.random.normal(kk, (B, Sk, D_MODEL), jnp.float32)
    xv = jax.random.normal(kv, (B, Sk, D_MODEL), jnp.float32)

    h_out, a_out = cross_attention(xq, xk, xv, params)
    jax.block_until_ready((h_out, a_out))
    h_ref, a_ref = _reference(xq, xk, xv, params)
    np.testing.assert_allclose(np.asarray(h_out), np.asarray(h_ref), rtol=1e-5, atol=1e-5)
    np.testing.assert_allclose(np.asarray(a_out), np.asarray(a_ref), rtol=1e-5, atol=1e-5)

    # Case 2: batch not divisible by the chosen block -> exercises the padded grid.
    B2 = 5
    kq2, kk2, kv2 = jax.random.split(jax.random.PRNGKey(1), 3)
    xq2 = jax.random.normal(kq2, (B2, Sq, D_MODEL), jnp.float32)
    xk2 = jax.random.normal(kk2, (B2, Sk, D_MODEL), jnp.float32)
    xv2 = jax.random.normal(kv2, (B2, Sk, D_MODEL), jnp.float32)

    h2, a2 = cross_attention(xq2, xk2, xv2, params)
    jax.block_until_ready((h2, a2))
    h2_ref, a2_ref = _reference(xq2, xk2, xv2, params)
    np.testing.assert_allclose(np.asarray(h2), np.asarray(h2_ref), rtol=1e-5, atol=1e-5)
    np.testing.assert_allclose(np.asarray(a2), np.asarray(a2_ref), rtol=1e-5, atol=1e-5)

    print("KERNEL_OK")
</pallas_src>

<mosaic_0001>
module attributes {stable_mosaic.version = 11 : i64} {
  func.func @_cross_attn_kernel(%arg0: i32, %arg1: memref<1x8x48xf32, #tpu.memory_space<vmem>>, %arg2: memref<1x8x48xf32, #tpu.memory_space<vmem>>, %arg3: memref<1x8x48xf32, #tpu.memory_space<vmem>>, %arg4: memref<3x48x16xf32, #tpu.memory_space<vmem>>, %arg5: memref<3x1x16xf32, #tpu.memory_space<vmem>>, %arg6: memref<3x48x16xf32, #tpu.memory_space<vmem>>, %arg7: memref<3x1x16xf32, #tpu.memory_space<vmem>>, %arg8: memref<3x48x16xf32, #tpu.memory_space<vmem>>, %arg9: memref<3x1x16xf32, #tpu.memory_space<vmem>>, %arg10: memref<3x16x48xf32, #tpu.memory_space<vmem>>, %arg11: memref<1x48xf32, #tpu.memory_space<vmem>>, %arg12: memref<1x8x48xf32, #tpu.memory_space<vmem>>, %arg13: memref<1x3x8x8xf32, #tpu.memory_space<vmem>>) attributes {dimension_semantics = [#tpu.dimension_semantics<parallel>], iteration_bounds = array<i64: 2>, scalar_prefetch = 0 : i64, scratch_operands = 0 : i64, tpu.core_type = #tpu.core_type<tc>, window_params = [{transform_indices = @transform_0, window_bounds = array<i64: 1, 8, 48>}, {transform_indices = @transform_1, window_bounds = array<i64: 1, 8, 48>}, {transform_indices = @transform_2, window_bounds = array<i64: 1, 8, 48>}, {pipeline_mode = #tpu.pipeline_mode<synchronous>, transform_indices = @transform_3, window_bounds = array<i64: 3, 48, 16>}, {pipeline_mode = #tpu.pipeline_mode<synchronous>, transform_indices = @transform_4, window_bounds = array<i64: 3, 1, 16>}, {pipeline_mode = #tpu.pipeline_mode<synchronous>, transform_indices = @transform_5, window_bounds = array<i64: 3, 48, 16>}, {pipeline_mode = #tpu.pipeline_mode<synchronous>, transform_indices = @transform_6, window_bounds = array<i64: 3, 1, 16>}, {pipeline_mode = #tpu.pipeline_mode<synchronous>, transform_indices = @transform_7, window_bounds = array<i64: 3, 48, 16>}, {pipeline_mode = #tpu.pipeline_mode<synchronous>, transform_indices = @transform_8, window_bounds = array<i64: 3, 1, 16>}, {pipeline_mode = #tpu.pipeline_mode<synchronous>, transform_indices = @transform_9, window_bounds = array<i64: 3, 16, 48>}, {pipeline_mode = #tpu.pipeline_mode<synchronous>, transform_indices = @transform_10, window_bounds = array<i64: 1, 48>}, {transform_indices = @transform_11, window_bounds = array<i64: 1, 8, 48>}, {transform_indices = @transform_12, window_bounds = array<i64: 1, 3, 8, 8>}]} {
    %c0 = arith.constant 0 : index
    %c0_0 = arith.constant 0 : index
    %c0_1 = arith.constant 0 : index
    %0 = vector.load %arg1[%c0, %c0_0, %c0_1] : memref<1x8x48xf32, #tpu.memory_space<vmem>>, vector<1x8x48xf32>
    %1 = vector.shape_cast %0 : vector<1x8x48xf32> to vector<8x48xf32>
    %c0_2 = arith.constant 0 : index
    %c0_3 = arith.constant 0 : index
    %c0_4 = arith.constant 0 : index
    %2 = vector.load %arg2[%c0_2, %c0_3, %c0_4] : memref<1x8x48xf32, #tpu.memory_space<vmem>>, vector<1x8x48xf32>
    %3 = vector.shape_cast %2 : vector<1x8x48xf32> to vector<8x48xf32>
    %c0_5 = arith.constant 0 : index
    %c0_6 = arith.constant 0 : index
    %c0_7 = arith.constant 0 : index
    %4 = vector.load %arg3[%c0_5, %c0_6, %c0_7] : memref<1x8x48xf32, #tpu.memory_space<vmem>>, vector<1x8x48xf32>
    %5 = vector.shape_cast %4 : vector<1x8x48xf32> to vector<8x48xf32>
    %c0_8 = arith.constant 0 : index
    %c0_9 = arith.constant 0 : index
    %6 = vector.load %arg11[%c0_8, %c0_9] : memref<1x48xf32, #tpu.memory_space<vmem>>, vector<1x48xf32>
    %7 = vector.shape_cast %6 : vector<1x48xf32> to vector<1x48xf32>
    %8 = vector.broadcast %7 : vector<1x48xf32> to vector<8x48xf32>
    %c0_10 = arith.constant 0 : index
    %c0_11 = arith.constant 0 : index
    %c0_12 = arith.constant 0 : index
    %9 = vector.load %arg4[%c0_10, %c0_11, %c0_12] : memref<3x48x16xf32, #tpu.memory_space<vmem>>, vector<1x48x16xf32>
    %10 = vector.shape_cast %9 : vector<1x48x16xf32> to vector<48x16xf32>
    %cst = arith.constant dense<0.000000e+00> : vector<8x16xf32>
    %11 = tpu.matmul %1, %10, %cst {dimension_numbers = #tpu.dot_dimension_numbers<[1], [0], [0], [1], [0, 0, 1, 1], [], []>} : vector<8x48xf32>, vector<48x16xf32>, vector<8x16xf32> -> vector<8x16xf32>
    %c0_13 = arith.constant 0 : index
    %c0_14 = arith.constant 0 : index
    %c0_15 = arith.constant 0 : index
    %12 = vector.load %arg5[%c0_13, %c0_14, %c0_15] : memref<3x1x16xf32, #tpu.memory_space<vmem>>, vector<1x1x16xf32>
    %13 = vector.shape_cast %12 : vector<1x1x16xf32> to vector<1x16xf32>
    %14 = vector.broadcast %13 : vector<1x16xf32> to vector<8x16xf32>
    %15 = arith.addf %11, %14 : vector<8x16xf32>
    %c0_16 = arith.constant 0 : index
    %c0_17 = arith.constant 0 : index
    %c0_18 = arith.constant 0 : index
    %16 = vector.load %arg6[%c0_16, %c0_17, %c0_18] : memref<3x48x16xf32, #tpu.memory_space<vmem>>, vector<1x48x16xf32>
    %17 = vector.shape_cast %16 : vector<1x48x16xf32> to vector<48x16xf32>
    %cst_19 = arith.constant dense<0.000000e+00> : vector<8x16xf32>
    %18 = tpu.matmul %3, %17, %cst_19 {dimension_numbers = #tpu.dot_dimension_numbers<[1], [0], [0], [1], [0, 0, 1, 1], [], []>} : vector<8x48xf32>, vector<48x16xf32>, vector<8x16xf32> -> vector<8x16xf32>
    %c0_20 = arith.constant 0 : index
    %c0_21 = arith.constant 0 : index
    %c0_22 = arith.constant 0 : index
    %19 = vector.load %arg7[%c0_20, %c0_21, %c0_22] : memref<3x1x16xf32, #tpu.memory_space<vmem>>, vector<1x1x16xf32>
    %20 = vector.shape_cast %19 : vector<1x1x16xf32> to vector<1x16xf32>
    %21 = vector.broadcast %20 : vector<1x16xf32> to vector<8x16xf32>
    %22 = arith.addf %18, %21 : vector<8x16xf32>
    %c0_23 = arith.constant 0 : index
    %c0_24 = arith.constant 0 : index
    %c0_25 = arith.constant 0 : index
    %23 = vector.load %arg8[%c0_23, %c0_24, %c0_25] : memref<3x48x16xf32, #tpu.memory_space<vmem>>, vector<1x48x16xf32>
    %24 = vector.shape_cast %23 : vector<1x48x16xf32> to vector<48x16xf32>
    %cst_26 = arith.constant dense<0.000000e+00> : vector<8x16xf32>
    %25 = tpu.matmul %5, %24, %cst_26 {dimension_numbers = #tpu.dot_dimension_numbers<[1], [0], [0], [1], [0, 0, 1, 1], [], []>} : vector<8x48xf32>, vector<48x16xf32>, vector<8x16xf32> -> vector<8x16xf32>
    %c0_27 = arith.constant 0 : index
    %c0_28 = arith.constant 0 : index
    %c0_29 = arith.constant 0 : index
    %26 = vector.load %arg9[%c0_27, %c0_28, %c0_29] : memref<3x1x16xf32, #tpu.memory_space<vmem>>, vector<1x1x16xf32>
    %27 = vector.shape_cast %26 : vector<1x1x16xf32> to vector<1x16xf32>
    %28 = vector.broadcast %27 : vector<1x16xf32> to vector<8x16xf32>
    %29 = arith.addf %25, %28 : vector<8x16xf32>
    %30 = vector.shape_cast %15 : vector<8x16xf32> to vector<1x8x16xf32>
    %31 = vector.shape_cast %22 : vector<8x16xf32> to vector<1x8x16xf32>
    %32 = vector.shape_cast %29 : vector<8x16xf32> to vector<1x8x16xf32>
    "tpu.trace_start"() <{level = 10 : i32, message = "bqd,bkd->bqk"}> : () -> ()
    %cst_30 = arith.constant dense<0.000000e+00> : vector<1x8x8xf32>
    %33 = tpu.matmul %30, %31, %cst_30 {dimension_numbers = #tpu.dot_dimension_numbers<[2], [2], [1], [1], [0, 0, 0, 1, 1, 1], [0], [0]>} : vector<1x8x16xf32>, vector<1x8x16xf32>, vector<1x8x8xf32> -> vector<1x8x8xf32>
    "tpu.trace_stop"() : () -> ()
    %cst_31 = arith.constant dense<0xFF800000> : vector<1x8xf32>
    %34 = vector.multi_reduction <maximumf>, %33, %cst_31 [2] : vector<1x8x8xf32> to vector<1x8xf32>
    %35 = vector.shape_cast %34 : vector<1x8xf32> to vector<1x8x1xf32>
    %36 = vector.broadcast %35 : vector<1x8x1xf32> to vector<1x8x8xf32>
    %37 = arith.subf %33, %36 : vector<1x8x8xf32>
    %38 = math.exp %37 : vector<1x8x8xf32>
    %cst_32 = arith.constant dense<0.000000e+00> : vector<1x8xf32>
    %39 = vector.multi_reduction <add>, %38, %cst_32 [2] : vector<1x8x8xf32> to vector<1x8xf32>
    %40 = vector.shape_cast %39 : vector<1x8xf32> to vector<1x8x1xf32>
    %41 = vector.broadcast %40 : vector<1x8x1xf32> to vector<1x8x8xf32>
    %42 = arith.divf %38, %41 : vector<1x8x8xf32>
    %43 = vector.shape_cast %42 : vector<1x8x8xf32> to vector<1x1x8x8xf32>
    %c0_33 = arith.constant 0 : index
    %c0_34 = arith.constant 0 : index
    %c0_35 = arith.constant 0 : index
    %c0_36 = arith.constant 0 : index
    %44 = vector.load %arg13[%c0_33, %c0_34, %c0_35, %c0_36] : memref<1x3x8x8xf32, #tpu.memory_space<vmem>>, vector<1x1x8x8xf32>
    tpu.vector_store %arg13[%c0_33, %c0_34, %c0_35, %c0_36], %43 {strides = array<i32>} : memref<1x3x8x8xf32, #tpu.memory_space<vmem>>, vector<1x1x8x8xf32>,
    "tpu.trace_start"() <{level = 10 : i32, message = "bqk,bkd->bqd"}> : () -> ()
    %cst_37 = arith.constant dense<0.000000e+00> : vector<1x8x16xf32>
    %45 = tpu.matmul %42, %32, %cst_37 {dimension_numbers = #tpu.dot_dimension_numbers<[2], [1], [1], [2], [0, 0, 0, 1, 1, 2], [0], [0]>} : vector<1x8x8xf32>, vector<1x8x16xf32>, vector<1x8x16xf32> -> vector<1x8x16xf32>
    "tpu.trace_stop"() : () -> ()
    %46 = vector.shape_cast %45 : vector<1x8x16xf32> to vector<8x16xf32>
    %c0_38 = arith.constant 0 : index
    %c0_39 = arith.constant 0 : index
    %c0_40 = arith.constant 0 : index
    %47 = vector.load %arg10[%c0_38, %c0_39, %c0_40] : memref<3x16x48xf32, #tpu.memory_space<vmem>>, vector<1x16x48xf32>
    %48 = vector.shape_cast %47 : vector<1x16x48xf32> to vector<16x48xf32>
    %cst_41 = arith.constant dense<0.000000e+00> : vector<8x48xf32>
    %49 = tpu.matmul %46, %48, %cst_41 {dimension_numbers = #tpu.dot_dimension_numbers<[1], [0], [0], [1], [0, 0, 1, 1], [], []>} : vector<8x16xf32>, vector<16x48xf32>, vector<8x48xf32> -> vector<8x48xf32>
    %50 = arith.addf %8, %49 : vector<8x48xf32>
    %c1 = arith.constant 1 : index
    %c0_42 = arith.constant 0 : index
    %c0_43 = arith.constant 0 : index
    %51 = vector.load %arg4[%c1, %c0_42, %c0_43] : memref<3x48x16xf32, #tpu.memory_space<vmem>>, vector<1x48x16xf32>
    %52 = vector.shape_cast %51 : vector<1x48x16xf32> to vector<48x16xf32>
    %cst_44 = arith.constant dense<0.000000e+00> : vector<8x16xf32>
    %53 = tpu.matmul %1, %52, %cst_44 {dimension_numbers = #tpu.dot_dimension_numbers<[1], [0], [0], [1], [0, 0, 1, 1], [], []>} : vector<8x48xf32>, vector<48x16xf32>, vector<8x16xf32> -> vector<8x16xf32>
    %c1_45 = arith.constant 1 : index
    %c0_46 = arith.constant 0 : index
    %c0_47 = arith.constant 0 : index
    %54 = vector.load %arg5[%c1_45, %c0_46, %c0_47] : memref<3x1x16xf32, #tpu.memory_space<vmem>>, vector<1x1x16xf32>
    %55 = vector.shape_cast %54 : vector<1x1x16xf32> to vector<1x16xf32>
    %56 = vector.broadcast %55 : vector<1x16xf32> to vector<8x16xf32>
    %57 = arith.addf %53, %56 : vector<8x16xf32>
    %c1_48 = arith.constant 1 : index
    %c0_49 = arith.constant 0 : index
    %c0_50 = arith.constant 0 : index
    %58 = vector.load %arg6[%c1_48, %c0_49, %c0_50] : memref<3x48x16xf32, #tpu.memory_space<vmem>>, vector<1x48x16xf32>
    %59 = vector.shape_cast %58 : vector<1x48x16xf32> to vector<48x16xf32>
    %cst_51 = arith.constant dense<0.000000e+00> : vector<8x16xf32>
    %60 = tpu.matmul %3, %59, %cst_51 {dimension_numbers = #tpu.dot_dimension_numbers<[1], [0], [0], [1], [0, 0, 1, 1], [], []>} : vector<8x48xf32>, vector<48x16xf32>, vector<8x16xf32> -> vector<8x16xf32>
    %c1_52 = arith.constant 1 : index
    %c0_53 = arith.constant 0 : index
    %c0_54 = arith.constant 0 : index
    %61 = vector.load %arg7[%c1_52, %c0_53, %c0_54] : memref<3x1x16xf32, #tpu.memory_space<vmem>>, vector<1x1x16xf32>
    %62 = vector.shape_cast %61 : vector<1x1x16xf32> to vector<1x16xf32>
    %63 = vector.broadcast %62 : vector<1x16xf32> to vector<8x16xf32>
    %64 = arith.addf %60, %63 : vector<8x16xf32>
    %c1_55 = arith.constant 1 : index
    %c0_56 = arith.constant 0 : index
    %c0_57 = arith.constant 0 : index
    %65 = vector.load %arg8[%c1_55, %c0_56, %c0_57] : memref<3x48x16xf32, #tpu.memory_space<vmem>>, vector<1x48x16xf32>
    %66 = vector.shape_cast %65 : vector<1x48x16xf32> to vector<48x16xf32>
    %cst_58 = arith.constant dense<0.000000e+00> : vector<8x16xf32>
    %67 = tpu.matmul %5, %66, %cst_58 {dimension_numbers = #tpu.dot_dimension_numbers<[1], [0], [0], [1], [0, 0, 1, 1], [], []>} : vector<8x48xf32>, vector<48x16xf32>, vector<8x16xf32> -> vector<8x16xf32>
    %c1_59 = arith.constant 1 : index
    %c0_60 = arith.constant 0 : index
    %c0_61 = arith.constant 0 : index
    %68 = vector.load %arg9[%c1_59, %c0_60, %c0_61] : memref<3x1x16xf32, #tpu.memory_space<vmem>>, vector<1x1x16xf32>
    %69 = vector.shape_cast %68 : vector<1x1x16xf32> to vector<1x16xf32>
    %70 = vector.broadcast %69 : vector<1x16xf32> to vector<8x16xf32>
    %71 = arith.addf %67, %70 : vector<8x16xf32>
    %72 = vector.shape_cast %57 : vector<8x16xf32> to vector<1x8x16xf32>
    %73 = vector.shape_cast %64 : vector<8x16xf32> to vector<1x8x16xf32>
    %74 = vector.shape_cast %71 : vector<8x16xf32> to vector<1x8x16xf32>
    "tpu.trace_start"() <{level = 10 : i32, message = "bqd,bkd->bqk"}> : () -> ()
    %cst_62 = arith.constant dense<0.000000e+00> : vector<1x8x8xf32>
    %75 = tpu.matmul %72, %73, %cst_62 {dimension_numbers = #tpu.dot_dimension_numbers<[2], [2], [1], [1], [0, 0, 0, 1, 1, 1], [0], [0]>} : vector<1x8x16xf32>, vector<1x8x16xf32>, vector<1x8x8xf32> -> vector<1x8x8xf32>
    "tpu.trace_stop"() : () -> ()
    %cst_63 = arith.constant dense<0xFF800000> : vector<1x8xf32>
    %76 = vector.multi_reduction <maximumf>, %75, %cst_63 [2] : vector<1x8x8xf32> to vector<1x8xf32>
    %77 = vector.shape_cast %76 : vector<1x8xf32> to vector<1x8x1xf32>
    %78 = vector.broadcast %77 : vector<1x8x1xf32> to vector<1x8x8xf32>
    %79 = arith.subf %75, %78 : vector<1x8x8xf32>
    %80 = math.exp %79 : vector<1x8x8xf32>
    %cst_64 = arith.constant dense<0.000000e+00> : vector<1x8xf32>
    %81 = vector.multi_reduction <add>, %80, %cst_64 [2] : vector<1x8x8xf32> to vector<1x8xf32>
    %82 = vector.shape_cast %81 : vector<1x8xf32> to vector<1x8x1xf32>
    %83 = vector.broadcast %82 : vector<1x8x1xf32> to vector<1x8x8xf32>
    %84 = arith.divf %80, %83 : vector<1x8x8xf32>
    %85 = vector.shape_cast %84 : vector<1x8x8xf32> to vector<1x1x8x8xf32>
    %c0_65 = arith.constant 0 : index
    %c1_66 = arith.constant 1 : index
    %c0_67 = arith.constant 0 : index
    %c0_68 = arith.constant 0 : index
    %86 = vector.load %arg13[%c0_65, %c1_66, %c0_67, %c0_68] : memref<1x3x8x8xf32, #tpu.memory_space<vmem>>, vector<1x1x8x8xf32>
    tpu.vector_store %arg13[%c0_65, %c1_66, %c0_67, %c0_68], %85 {strides = array<i32>} : memref<1x3x8x8xf32, #tpu.memory_space<vmem>>, vector<1x1x8x8xf32>,
    "tpu.trace_start"() <{level = 10 : i32, message = "bqk,bkd->bqd"}> : () -> ()
    %cst_69 = arith.constant dense<0.000000e+00> : vector<1x8x16xf32>
    %87 = tpu.matmul %84, %74, %cst_69 {dimension_numbers = #tpu.dot_dimension_numbers<[2], [1], [1], [2], [0, 0, 0, 1, 1, 2], [0], [0]>} : vector<1x8x8xf32>, vector<1x8x16xf32>, vector<1x8x16xf32> -> vector<1x8x16xf32>
    "tpu.trace_stop"() : () -> ()
    %88 = vector.shape_cast %87 : vector<1x8x16xf32> to vector<8x16xf32>
    %c1_70 = arith.constant 1 : index
    %c0_71 = arith.constant 0 : index
    %c0_72 = arith.constant 0 : index
    %89 = vector.load %arg10[%c1_70, %c0_71, %c0_72] : memref<3x16x48xf32, #tpu.memory_space<vmem>>, vector<1x16x48xf32>
    %90 = vector.shape_cast %89 : vector<1x16x48xf32> to vector<16x48xf32>
    %cst_73 = arith.constant dense<0.000000e+00> : vector<8x48xf32>
    %91 = tpu.matmul %88, %90, %cst_73 {dimension_numbers = #tpu.dot_dimension_numbers<[1], [0], [0], [1], [0, 0, 1, 1], [], []>} : vector<8x16xf32>, vector<16x48xf32>, vector<8x48xf32> -> vector<8x48xf32>
    %92 = arith.addf %50, %91 : vector<8x48xf32>
    %c2 = arith.constant 2 : index
    %c0_74 = arith.constant 0 : index
    %c0_75 = arith.constant 0 : index
    %93 = vector.load %arg4[%c2, %c0_74, %c0_75] : memref<3x48x16xf32, #tpu.memory_space<vmem>>, vector<1x48x16xf32>
    %94 = vector.shape_cast %93 : vector<1x48x16xf32> to vector<48x16xf32>
    %cst_76 = arith.constant dense<0.000000e+00> : vector<8x16xf32>
    %95 = tpu.matmul %1, %94, %cst_76 {dimension_numbers = #tpu.dot_dimension_numbers<[1], [0], [0], [1], [0, 0, 1, 1], [], []>} : vector<8x48xf32>, vector<48x16xf32>, vector<8x16xf32> -> vector<8x16xf32>
    %c2_77 = arith.constant 2 : index
    %c0_78 = arith.constant 0 : index
    %c0_79 = arith.constant 0 : index
    %96 = vector.load %arg5[%c2_77, %c0_78, %c0_79] : memref<3x1x16xf32, #tpu.memory_space<vmem>>, vector<1x1x16xf32>
    %97 = vector.shape_cast %96 : vector<1x1x16xf32> to vector<1x16xf32>
    %98 = vector.broadcast %97 : vector<1x16xf32> to vector<8x16xf32>
    %99 = arith.addf %95, %98 : vector<8x16xf32>
    %c2_80 = arith.constant 2 : index
    %c0_81 = arith.constant 0 : index
    %c0_82 = arith.constant 0 : index
    %100 = vector.load %arg6[%c2_80, %c0_81, %c0_82] : memref<3x48x16xf32, #tpu.memory_space<vmem>>, vector<1x48x16xf32>
    %101 = vector.shape_cast %100 : vector<1x48x16xf32> to vector<48x16xf32>
    %cst_83 = arith.constant dense<0.000000e+00> : vector<8x16xf32>
    %102 = tpu.matmul %3, %101, %cst_83 {dimension_numbers = #tpu.dot_dimension_numbers<[1], [0], [0], [1], [0, 0, 1, 1], [], []>} : vector<8x48xf32>, vector<48x16xf32>, vector<8x16xf32> -> vector<8x16xf32>
    %c2_84 = arith.constant 2 : index
    %c0_85 = arith.constant 0 : index
    %c0_86 = arith.constant 0 : index
    %103 = vector.load %arg7[%c2_84, %c0_85, %c0_86] : memref<3x1x16xf32, #tpu.memory_space<vmem>>, vector<1x1x16xf32>
    %104 = vector.shape_cast %103 : vector<1x1x16xf32> to vector<1x16xf32>
    %105 = vector.broadcast %104 : vector<1x16xf32> to vector<8x16xf32>
    %106 = arith.addf %102, %105 : vector<8x16xf32>
    %c2_87 = arith.constant 2 : index
    %c0_88 = arith.constant 0 : index
    %c0_89 = arith.constant 0 : index
    %107 = vector.load %arg8[%c2_87, %c0_88, %c0_89] : memref<3x48x16xf32, #tpu.memory_space<vmem>>, vector<1x48x16xf32>
    %108 = vector.shape_cast %107 : vector<1x48x16xf32> to vector<48x16xf32>
    %cst_90 = arith.constant dense<0.000000e+00> : vector<8x16xf32>
    %109 = tpu.matmul %5, %108, %cst_90 {dimension_numbers = #tpu.dot_dimension_numbers<[1], [0], [0], [1], [0, 0, 1, 1], [], []>} : vector<8x48xf32>, vector<48x16xf32>, vector<8x16xf32> -> vector<8x16xf32>
    %c2_91 = arith.constant 2 : index
    %c0_92 = arith.constant 0 : index
    %c0_93 = arith.constant 0 : index
    %110 = vector.load %arg9[%c2_91, %c0_92, %c0_93] : memref<3x1x16xf32, #tpu.memory_space<vmem>>, vector<1x1x16xf32>
    %111 = vector.shape_cast %110 : vector<1x1x16xf32> to vector<1x16xf32>
    %112 = vector.broadcast %111 : vector<1x16xf32> to vector<8x16xf32>
    %113 = arith.addf %109, %112 : vector<8x16xf32>
    %114 = vector.shape_cast %99 : vector<8x16xf32> to vector<1x8x16xf32>
    %115 = vector.shape_cast %106 : vector<8x16xf32> to vector<1x8x16xf32>
    %116 = vector.shape_cast %113 : vector<8x16xf32> to vector<1x8x16xf32>
    "tpu.trace_start"() <{level = 10 : i32, message = "bqd,bkd->bqk"}> : () -> ()
    %cst_94 = arith.constant dense<0.000000e+00> : vector<1x8x8xf32>
    %117 = tpu.matmul %114, %115, %cst_94 {dimension_numbers = #tpu.dot_dimension_numbers<[2], [2], [1], [1], [0, 0, 0, 1, 1, 1], [0], [0]>} : vector<1x8x16xf32>, vector<1x8x16xf32>, vector<1x8x8xf32> -> vector<1x8x8xf32>
    "tpu.trace_stop"() : () -> ()
    %cst_95 = arith.constant dense<0xFF800000> : vector<1x8xf32>
    %118 = vector.multi_reduction <maximumf>, %117, %cst_95 [2] : vector<1x8x8xf32> to vector<1x8xf32>
    %119 = vector.shape_cast %118 : vector<1x8xf32> to vector<1x8x1xf32>
    %120 = vector.broadcast %119 : vector<1x8x1xf32> to vector<1x8x8xf32>
    %121 = arith.subf %117, %120 : vector<1x8x8xf32>
    %122 = math.exp %121 : vector<1x8x8xf32>
    %cst_96 = arith.constant dense<0.000000e+00> : vector<1x8xf32>
    %123 = vector.multi_reduction <add>, %122, %cst_96 [2] : vector<1x8x8xf32> to vector<1x8xf32>
    %124 = vector.shape_cast %123 : vector<1x8xf32> to vector<1x8x1xf32>
    %125 = vector.broadcast %124 : vector<1x8x1xf32> to vector<1x8x8xf32>
    %126 = arith.divf %122, %125 : vector<1x8x8xf32>
    %127 = vector.shape_cast %126 : vector<1x8x8xf32> to vector<1x1x8x8xf32>
    %c0_97 = arith.constant 0 : index
    %c2_98 = arith.constant 2 : index
    %c0_99 = arith.constant 0 : index
    %c0_100 = arith.constant 0 : index
    %128 = vector.load %arg13[%c0_97, %c2_98, %c0_99, %c0_100] : memref<1x3x8x8xf32, #tpu.memory_space<vmem>>, vector<1x1x8x8xf32>
    tpu.vector_store %arg13[%c0_97, %c2_98, %c0_99, %c0_100], %127 {strides = array<i32>} : memref<1x3x8x8xf32, #tpu.memory_space<vmem>>, vector<1x1x8x8xf32>,
    "tpu.trace_start"() <{level = 10 : i32, message = "bqk,bkd->bqd"}> : () -> ()
    %cst_101 = arith.constant dense<0.000000e+00> : vector<1x8x16xf32>
    %129 = tpu.matmul %126, %116, %cst_101 {dimension_numbers = #tpu.dot_dimension_numbers<[2], [1], [1], [2], [0, 0, 0, 1, 1, 2], [0], [0]>} : vector<1x8x8xf32>, vector<1x8x16xf32>, vector<1x8x16xf32> -> vector<1x8x16xf32>
    "tpu.trace_stop"() : () -> ()
    %130 = vector.shape_cast %129 : vector<1x8x16xf32> to vector<8x16xf32>
    %c2_102 = arith.constant 2 : index
    %c0_103 = arith.constant 0 : index
    %c0_104 = arith.constant 0 : index
    %131 = vector.load %arg10[%c2_102, %c0_103, %c0_104] : memref<3x16x48xf32, #tpu.memory_space<vmem>>, vector<1x16x48xf32>
    %132 = vector.shape_cast %131 : vector<1x16x48xf32> to vector<16x48xf32>
    %cst_105 = arith.constant dense<0.000000e+00> : vector<8x48xf32>
    %133 = tpu.matmul %130, %132, %cst_105 {dimension_numbers = #tpu.dot_dimension_numbers<[1], [0], [0], [1], [0, 0, 1, 1], [], []>} : vector<8x16xf32>, vector<16x48xf32>, vector<8x48xf32> -> vector<8x48xf32>
    %134 = arith.addf %92, %133 : vector<8x48xf32>
    %135 = vector.shape_cast %134 : vector<8x48xf32> to vector<1x8x48xf32>
    %c0_106 = arith.constant 0 : index
    %c0_107 = arith.constant 0 : index
    %c0_108 = arith.constant 0 : index
    %136 = vector.load %arg12[%c0_106, %c0_107, %c0_108] : memref<1x8x48xf32, #tpu.memory_space<vmem>>, vector<1x8x48xf32>
    tpu.vector_store %arg12[%c0_106, %c0_107, %c0_108], %135 {strides = array<i32>} : memref<1x8x48xf32, #tpu.memory_space<vmem>>, vector<1x8x48xf32>,
    return
  }
  func.func @transform_0(%arg0: i32) -> (i32, i32, i32) {
    %c0_i32 = arith.constant 0 : i32
    %c0_i32_0 = arith.constant 0 : i32
    %c0_i32_1 = arith.constant 0 : i32
    return %arg0, %c0_i32, %c0_i32_0 : i32, i32, i32
  }
  func.func @transform_1(%arg0: i32) -> (i32, i32, i32) {
    %c0_i32 = arith.constant 0 : i32
    %c0_i32_0 = arith.constant 0 : i32
    %c0_i32_1 = arith.constant 0 : i32
    return %arg0, %c0_i32, %c0_i32_0 : i32, i32, i32
  }
  func.func @transform_2(%arg0: i32) -> (i32, i32, i32) {
    %c0_i32 = arith.constant 0 : i32
    %c0_i32_0 = arith.constant 0 : i32
    %c0_i32_1 = arith.constant 0 : i32
    return %arg0, %c0_i32, %c0_i32_0 : i32, i32, i32
  }
  func.func @transform_3(%arg0: i32) -> (i32, i32, i32) {
    %c0_i32 = arith.constant 0 : i32
    %c0_i32_0 = arith.constant 0 : i32
    %c0_i32_1 = arith.constant 0 : i32
    %c0_i32_2 = arith.constant 0 : i32
    return %c0_i32, %c0_i32_0, %c0_i32_1 : i32, i32, i32
  }
  func.func @transform_4(%arg0: i32) -> (i32, i32, i32) {
    %c0_i32 = arith.constant 0 : i32
    %c0_i32_0 = arith.constant 0 : i32
    %c0_i32_1 = arith.constant 0 : i32
    %c0_i32_2 = arith.constant 0 : i32
    return %c0_i32, %c0_i32_0, %c0_i32_1 : i32, i32, i32
  }
  func.func @transform_5(%arg0: i32) -> (i32, i32, i32) {
    %c0_i32 = arith.constant 0 : i32
    %c0_i32_0 = arith.constant 0 : i32
    %c0_i32_1 = arith.constant 0 : i32
    %c0_i32_2 = arith.constant 0 : i32
    return %c0_i32, %c0_i32_0, %c0_i32_1 : i32, i32, i32
  }
  func.func @transform_6(%arg0: i32) -> (i32, i32, i32) {
    %c0_i32 = arith.constant 0 : i32
    %c0_i32_0 = arith.constant 0 : i32
    %c0_i32_1 = arith.constant 0 : i32
    %c0_i32_2 = arith.constant 0 : i32
    return %c0_i32, %c0_i32_0, %c0_i32_1 : i32, i32, i32
  }
  func.func @transform_7(%arg0: i32) -> (i32, i32, i32) {
    %c0_i32 = arith.constant 0 : i32
    %c0_i32_0 = arith.constant 0 : i32
    %c0_i32_1 = arith.constant 0 : i32
    %c0_i32_2 = arith.constant 0 : i32
    return %c0_i32, %c0_i32_0, %c0_i32_1 : i32, i32, i32
  }
  func.func @transform_8(%arg0: i32) -> (i32, i32, i32) {
    %c0_i32 = arith.constant 0 : i32
    %c0_i32_0 = arith.constant 0 : i32
    %c0_i32_1 = arith.constant 0 : i32
    %c0_i32_2 = arith.constant 0 : i32
    return %c0_i32, %c0_i32_0, %c0_i32_1 : i32, i32, i32
  }
  func.func @transform_9(%arg0: i32) -> (i32, i32, i32) {
    %c0_i32 = arith.constant 0 : i32
    %c0_i32_0 = arith.constant 0 : i32
    %c0_i32_1 = arith.constant 0 : i32
    %c0_i32_2 = arith.constant 0 : i32
    return %c0_i32, %c0_i32_0, %c0_i32_1 : i32, i32, i32
  }
  func.func @transform_10(%arg0: i32) -> (i32, i32) {
    %c0_i32 = arith.constant 0 : i32
    %c0_i32_0 = arith.constant 0 : i32
    %c0_i32_1 = arith.constant 0 : i32
    return %c0_i32, %c0_i32_0 : i32, i32
  }
  func.func @transform_11(%arg0: i32) -> (i32, i32, i32) {
    %c0_i32 = arith.constant 0 : i32
    %c0_i32_0 = arith.constant 0 : i32
    %c0_i32_1 = arith.constant 0 : i32
    return %arg0, %c0_i32, %c0_i32_0 : i32, i32, i32
  }
  func.func @transform_12(%arg0: i32) -> (i32, i32, i32, i32) {
    %c0_i32 = arith.constant 0 : i32
    %c0_i32_0 = arith.constant 0 : i32
    %c0_i32_1 = arith.constant 0 : i32
    %c0_i32_2 = arith.constant 0 : i32
    return %arg0, %c0_i32, %c0_i32_0, %c0_i32_1 : i32, i32, i32, i32
  }
}

</mosaic_0001>

<llo_original>
// kernel: tpu_custom_call.1
$region0: #{tpu_custom_call.1}
  #allocation0 [shape = 'u32[]', space=smem, size = 0x4, offset = 0x4, fixed_abs, tag = 'smem constant byte address 0x4 - core index']
  #allocation1 [shape = 'u32[144,128]{1,0:T(1,128)}', space=vmem, size = 0x12000, scoped, tag = 'internal scratch']
  %s0 = inlined_call_operand.vmem [shape: f32[2,8,48], index: 0, kind: input, shape index: {}]
  %s1 = inlined_call_operand.vmem [shape: f32[2,8,48], index: 1, kind: input, shape index: {}]
  %s2 = inlined_call_operand.vmem [shape: f32[2,8,48], index: 2, kind: input, shape index: {}]
  %s3 = inlined_call_operand.vmem [shape: f32[3,48,16], index: 3, kind: input, shape index: {}]
  %s4 = inlined_call_operand.vmem [shape: f32[3,1,16], index: 4, kind: input, shape index: {}]
  %s5 = inlined_call_operand.vmem [shape: f32[3,48,16], index: 5, kind: input, shape index: {}]
  %s6 = inlined_call_operand.vmem [shape: f32[3,1,16], index: 6, kind: input, shape index: {}]
  %s7 = inlined_call_operand.vmem [shape: f32[3,48,16], index: 7, kind: input, shape index: {}]
  %s8 = inlined_call_operand.vmem [shape: f32[3,1,16], index: 8, kind: input, shape index: {}]
  %s9 = inlined_call_operand.vmem [shape: f32[3,16,48], index: 9, kind: input, shape index: {}]
  %s10 = inlined_call_operand.vmem [shape: f32[1,48], index: 10, kind: input, shape index: {}]
  %s11 = inlined_call_operand.hbm [shape: f32[2,8,48], index: 11, kind: output, shape index: {0}]
  %s12 = inlined_call_operand.hbm [shape: f32[2,3,8,8], index: 12, kind: output, shape index: {1}]
  %13 = xla_tuple %s11, %s12
  %s14 = sld [smem:[#allocation0]]
  $region85: #{tpu_custom_call.1} parent=0
    _
  %s16 = ssub.s32 1, %s14
  %s17 = scalar_select 0, %s16, %s14
  $region1: #{tpu_custom_call.1} parent=0
    #allocation2 [shape = 'u8[8192]{0}', space=vmem, size = 0x2000, scoped, tag = 'output window, operand 0']
    #allocation3 [shape = 's32[2]{0}', space=sflag, size = 0x8, scoped, tag = 'scoped memory for tpu_custom_call.1']
    #allocation4 [shape = 'u8[24576]{0}', space=vmem, size = 0x6000, scoped, tag = 'output window, operand 1']
    #allocation5 [shape = 's32[2]{0}', space=sflag, size = 0x8, scoped, tag = 'scoped memory for tpu_custom_call.1']
    %18 = vsyncpa [#allocation3], 0
    %s19 = scalar_lea.sflag [#allocation3], 1
    %20 = vsyncpa %s19, 0
    %21 = vsyncpa [#allocation5], 0
    %s22 = scalar_lea.sflag [#allocation5], 1
    %23 = vsyncpa %s22, 0
    loop: start=0, step=1, limit=4
    $region2: #{tpu_custom_call.1} parent=1 // loop_pre_header
      _
    $region3: #{tpu_custom_call.1} parent=1 // loop_header
      %s25 = sphi 0, %s29
      %p26 = scmp.ge.s32.totalorder %s25, 4
      %s35 = sphi 0, %s37
      %s38 = sphi 0, %s35
      %s39 = sphi 0, %s38
      %s55 = sphi 0, %s39
      %s61 = sphi 0, %s63
      %s64 = sphi 0, %s61
      %s65 = sphi 0, %s64
      %s81 = sphi 0, %s65
      %s87 = sphi 0, %s89
      %s90 = sphi 0, %s87
      %s91 = sphi 0, %s90
      %s107 = sphi 0, %s91
      %s111 = sphi 0, %s111
      %s113 = sphi 0, %s111
      %s114 = sphi 0, %s113
      %s128 = sphi 0, %s114
      %s132 = sphi 0, %s132
      %s134 = sphi 0, %s132
      %s135 = sphi 0, %s134
      %s149 = sphi 0, %s135
      %s153 = sphi 0, %s153
      %s155 = sphi 0, %s153
      %s156 = sphi 0, %s155
      %s170 = sphi 0, %s156
      %s174 = sphi 0, %s174
      %s176 = sphi 0, %s174
      %s177 = sphi 0, %s176
      %s191 = sphi 0, %s177
      %s195 = sphi 0, %s195
      %s197 = sphi 0, %s195
      %s198 = sphi 0, %s197
      %s212 = sphi 0, %s198
      %s216 = sphi 0, %s216
      %s218 = sphi 0, %s216
      %s219 = sphi 0, %s218
      %s233 = sphi 0, %s219
      %s237 = sphi 0, %s237
      %s239 = sphi 0, %s237
      %s240 = sphi 0, %s239
      %s254 = sphi 0, %s240
      %s258 = sphi 0, %s258
      %s260 = sphi 0, %s258
      %s261 = sphi 0, %s260
      %s275 = sphi 0, %s261
      %s281 = sphi 0, %s283
      %s284 = sphi 0, %s281
      %s285 = sphi 0, %s284
      %s301 = sphi 0, %s285
      %s307 = sphi 0, %s309
      %s310 = sphi 0, %s307
      %s311 = sphi 0, %s310
      %s327 = sphi 0, %s311
    $region4: #{tpu_custom_call.1} parent=1 // loop_header_branch
      %28 = sbr.rel (%p26) target = $region8
    $region5: #{tpu_custom_call.1} parent=1 // loop_body
      %s30 = ssub.s32 %s25, 1
      %s31 = ssub.s32 %s25, 2
      %s32 = sadd.s32 %s25, 1
      %s33 = ssub.s32 %s25, %s32
      %p34 = scmp.eq.s32.totalorder %s33, 0
      %s36 = sadd.s32 %s35, 1
      %s37 = scalar_select %p34, %s35, %s36
      %p40 = pneg %p34
      %p41 = scmp.eq.s32.totalorder %s25, 1
      %p42 = por %p40, %p41
      %p43 = scmp.ne.s32.totalorder %s35, %s38
      %p44 = scmp.eq.s32.totalorder %s25, 0
      %p45 = por %p43, %p44
      %p46 = scmp.ne.s32.totalorder %s35, %s38
      %p47 = scmp.eq.s32.totalorder %s30, 1
      %p48 = por %p46, %p47
      %p49 = scmp.ne.s32.totalorder %s38, %s39
      %p50 = scmp.eq.s32.totalorder %s30, 0
      %p51 = por %p49, %p50
      %p52 = scmp.ne.s32.totalorder %s38, %s39
      %p53 = scmp.eq.s32.totalorder %s31, 1
      %p54 = por %p52, %p53
      %p56 = scmp.ne.s32.totalorder %s39, %s55
      %p57 = scmp.eq.s32.totalorder %s31, 0
      %p58 = por %p56, %p57
      %s59 = ssub.s32 %s25, %s32
      %p60 = scmp.eq.s32.totalorder %s59, 0
      %s62 = sadd.s32 %s61, 1
      %s63 = scalar_select %p60, %s61, %s62
      %p66 = pneg %p60
      %p67 = scmp.eq.s32.totalorder %s25, 1
      %p68 = por %p66, %p67
      %p69 = scmp.ne.s32.totalorder %s61, %s64
      %p70 = scmp.eq.s32.totalorder %s25, 0
      %p71 = por %p69, %p70
      %p72 = scmp.ne.s32.totalorder %s61, %s64
      %p73 = scmp.eq.s32.totalorder %s30, 1
      %p74 = por %p72, %p73
      %p75 = scmp.ne.s32.totalorder %s64, %s65
      %p76 = scmp.eq.s32.totalorder %s30, 0
      %p77 = por %p75, %p76
      %p78 = scmp.ne.s32.totalorder %s64, %s65
      %p79 = scmp.eq.s32.totalorder %s31, 1
      %p80 = por %p78, %p79
      %p82 = scmp.ne.s32.totalorder %s65, %s81
      %p83 = scmp.eq.s32.totalorder %s31, 0
      %p84 = por %p82, %p83
      %s85 = ssub.s32 %s25, %s32
      %p86 = scmp.eq.s32.totalorder %s85, 0
      %s88 = sadd.s32 %s87, 1
      %s89 = scalar_select %p86, %s87, %s88
      %p92 = pneg %p86
      %p93 = scmp.eq.s32.totalorder %s25, 1
      %p94 = por %p92, %p93
      %p95 = scmp.ne.s32.totalorder %s87, %s90
      %p96 = scmp.eq.s32.totalorder %s25, 0
      %p97 = por %p95, %p96
      %p98 = scmp.ne.s32.totalorder %s87, %s90
      %p99 = scmp.eq.s32.totalorder %s30, 1
      %p100 = por %p98, %p99
      %p101 = scmp.ne.s32.totalorder %s90, %s91
      %p102 = scmp.eq.s32.totalorder %s30, 0
      %p103 = por %p101, %p102
      %p104 = scmp.ne.s32.totalorder %s90, %s91
      %p105 = scmp.eq.s32.totalorder %s31, 1
      %p106 = por %p104, %p105
      %p108 = scmp.ne.s32.totalorder %s91, %s107
      %p109 = scmp.eq.s32.totalorder %s31, 0
      %p110 = por %p108, %p109
      %s112 = sadd.s32 %s111, 1
      %p115 = scmp.eq.s32.totalorder %s25, 1
      %p116 = scmp.ne.s32.totalorder %s111, %s113
      %p117 = scmp.eq.s32.totalorder %s25, 0
      %p118 = por %p116, %p117
      %p119 = scmp.ne.s32.totalorder %s111, %s113
      %p120 = scmp.eq.s32.totalorder %s30, 1
      %p121 = por %p119, %p120
      %p122 = scmp.ne.s32.totalorder %s113, %s114
      %p123 = scmp.eq.s32.totalorder %s30, 0
      %p124 = por %p122, %p123
      %p125 = scmp.ne.s32.totalorder %s113, %s114
      %p126 = scmp.eq.s32.totalorder %s31, 1
      %p127 = por %p125, %p126
      %p129 = scmp.ne.s32.totalorder %s114, %s128
      %p130 = scmp.eq.s32.totalorder %s31, 0
      %p131 = por %p129, %p130
      %s133 = sadd.s32 %s132, 1
      %p136 = scmp.eq.s32.totalorder %s25, 1
      %p137 = scmp.ne.s32.totalorder %s132, %s134
      %p138 = scmp.eq.s32.totalorder %s25, 0
      %p139 = por %p137, %p138
      %p140 = scmp.ne.s32.totalorder %s132, %s134
      %p141 = scmp.eq.s32.totalorder %s30, 1
      %p142 = por %p140, %p141
      %p143 = scmp.ne.s32.totalorder %s134, %s135
      %p144 = scmp.eq.s32.totalorder %s30, 0
      %p145 = por %p143, %p144
      %p146 = scmp.ne.s32.totalorder %s134, %s135
      %p147 = scmp.eq.s32.totalorder %s31, 1
      %p148 = por %p146, %p147
      %p150 = scmp.ne.s32.totalorder %s135, %s149
      %p151 = scmp.eq.s32.totalorder %s31, 0
      %p152 = por %p150, %p151
      %s154 = sadd.s32 %s153, 1
      %p157 = scmp.eq.s32.totalorder %s25, 1
      %p158 = scmp.ne.s32.totalorder %s153, %s155
      %p159 = scmp.eq.s32.totalorder %s25, 0
      %p160 = por %p158, %p159
      %p161 = scmp.ne.s32.totalorder %s153, %s155
      %p162 = scmp.eq.s32.totalorder %s30, 1
      %p163 = por %p161, %p162
      %p164 = scmp.ne.s32.totalorder %s155, %s156
      %p165 = scmp.eq.s32.totalorder %s30, 0
      %p166 = por %p164, %p165
      %p167 = scmp.ne.s32.totalorder %s155, %s156
      %p168 = scmp.eq.s32.totalorder %s31, 1
      %p169 = por %p167, %p168
      %p171 = scmp.ne.s32.totalorder %s156, %s170
      %p172 = scmp.eq.s32.totalorder %s31, 0
      %p173 = por %p171, %p172
      %s175 = sadd.s32 %s174, 1
      %p178 = scmp.eq.s32.totalorder %s25, 1
      %p179 = scmp.ne.s32.totalorder %s174, %s176
      %p180 = scmp.eq.s32.totalorder %s25, 0
      %p181 = por %p179, %p180
      %p182 = scmp.ne.s32.totalorder %s174, %s176
      %p183 = scmp.eq.s32.totalorder %s30, 1
      %p184 = por %p182, %p183
      %p185 = scmp.ne.s32.totalorder %s176, %s177
      %p186 = scmp.eq.s32.totalorder %s30, 0
      %p187 = por %p185, %p186
      %p188 = scmp.ne.s32.totalorder %s176, %s177
      %p189 = scmp.eq.s32.totalorder %s31, 1
      %p190 = por %p188, %p189
      %p192 = scmp.ne.s32.totalorder %s177, %s191
      %p193 = scmp.eq.s32.totalorder %s31, 0
      %p194 = por %p192, %p193
      %s196 = sadd.s32 %s195, 1
      %p199 = scmp.eq.s32.totalorder %s25, 1
      %p200 = scmp.ne.s32.totalorder %s195, %s197
      %p201 = scmp.eq.s32.totalorder %s25, 0
      %p202 = por %p200, %p201
      %p203 = scmp.ne.s32.totalorder %s195, %s197
      %p204 = scmp.eq.s32.totalorder %s30, 1
      %p205 = por %p203, %p204
      %p206 = scmp.ne.s32.totalorder %s197, %s198
      %p207 = scmp.eq.s32.totalorder %s30, 0
      %p208 = por %p206, %p207
      %p209 = scmp.ne.s32.totalorder %s197, %s198
      %p210 = scmp.eq.s32.totalorder %s31, 1
      %p211 = por %p209, %p210
      %p213 = scmp.ne.s32.totalorder %s198, %s212
      %p214 = scmp.eq.s32.totalorder %s31, 0
      %p215 = por %p213, %p214
      %s217 = sadd.s32 %s216, 1
      %p220 = scmp.eq.s32.totalorder %s25, 1
      %p221 = scmp.ne.s32.totalorder %s216, %s218
      %p222 = scmp.eq.s32.totalorder %s25, 0
      %p223 = por %p221, %p222
      %p224 = scmp.ne.s32.totalorder %s216, %s218
      %p225 = scmp.eq.s32.totalorder %s30, 1
      %p226 = por %p224, %p225
      %p227 = scmp.ne.s32.totalorder %s218, %s219
      %p228 = scmp.eq.s32.totalorder %s30, 0
      %p229 = por %p227, %p228
      %p230 = scmp.ne.s32.totalorder %s218, %s219
      %p231 = scmp.eq.s32.totalorder %s31, 1
      %p232 = por %p230, %p231
      %p234 = scmp.ne.s32.totalorder %s219, %s233
      %p235 = scmp.eq.s32.totalorder %s31, 0
      %p236 = por %p234, %p235
      %s238 = sadd.s32 %s237, 1
      %p241 = scmp.eq.s32.totalorder %s25, 1
      %p242 = scmp.ne.s32.totalorder %s237, %s239
      %p243 = scmp.eq.s32.totalorder %s25, 0
      %p244 = por %p242, %p243
      %p245 = scmp.ne.s32.totalorder %s237, %s239
      %p246 = scmp.eq.s32.totalorder %s30, 1
      %p247 = por %p245, %p246
      %p248 = scmp.ne.s32.totalorder %s239, %s240
      %p249 = scmp.eq.s32.totalorder %s30, 0
      %p250 = por %p248, %p249
      %p251 = scmp.ne.s32.totalorder %s239, %s240
      %p252 = scmp.eq.s32.totalorder %s31, 1
      %p253 = por %p251, %p252
      %p255 = scmp.ne.s32.totalorder %s240, %s254
      %p256 = scmp.eq.s32.totalorder %s31, 0
      %p257 = por %p255, %p256
      %s259 = sadd.s32 %s258, 1
      %p262 = scmp.eq.s32.totalorder %s25, 1
      %p263 = scmp.ne.s32.totalorder %s258, %s260
      %p264 = scmp.eq.s32.totalorder %s25, 0
      %p265 = por %p263, %p264
      %p266 = scmp.ne.s32.totalorder %s258, %s260
      %p267 = scmp.eq.s32.totalorder %s30, 1
      %p268 = por %p266, %p267
      %p269 = scmp.ne.s32.totalorder %s260, %s261
      %p270 = scmp.eq.s32.totalorder %s30, 0
      %p271 = por %p269, %p270
      %p272 = scmp.ne.s32.totalorder %s260, %s261
      %p273 = scmp.eq.s32.totalorder %s31, 1
      %p274 = por %p272, %p273
      %p276 = scmp.ne.s32.totalorder %s261, %s275
      %p277 = scmp.eq.s32.totalorder %s31, 0
      %p278 = por %p276, %p277
      %s279 = ssub.s32 %s25, %s32
      %p280 = scmp.eq.s32.totalorder %s279, 0
      %s282 = sadd.s32 %s281, 1
      %s283 = scalar_select %p280, %s281, %s282
      %p286 = pneg %p280
      %p287 = scmp.eq.s32.totalorder %s25, 1
      %p288 = por %p286, %p287
      %p289 = scmp.ne.s32.totalorder %s281, %s284
      %p290 = scmp.eq.s32.totalorder %s25, 0
      %p291 = por %p289, %p290
      %p292 = scmp.ne.s32.totalorder %s281, %s284
      %p293 = scmp.eq.s32.totalorder %s30, 1
      %p294 = por %p292, %p293
      %p295 = scmp.ne.s32.totalorder %s284, %s285
      %p296 = scmp.eq.s32.totalorder %s30, 0
      %p297 = por %p295, %p296
      %p298 = scmp.ne.s32.totalorder %s284, %s285
      %p299 = scmp.eq.s32.totalorder %s31, 1
      %p300 = por %p298, %p299
      %p302 = scmp.ne.s32.totalorder %s285, %s301
      %p303 = scmp.eq.s32.totalorder %s31, 0
      %p304 = por %p302, %p303
      %s305 = ssub.s32 %s25, %s32
      %p306 = scmp.eq.s32.totalorder %s305, 0
      %s308 = sadd.s32 %s307, 1
      %s309 = scalar_select %p306, %s307, %s308
      %p312 = pneg %p306
      %p313 = scmp.eq.s32.totalorder %s25, 1
      %p314 = por %p312, %p313
      %p315 = scmp.ne.s32.totalorder %s307, %s310
      %p316 = scmp.eq.s32.totalorder %s25, 0
      %p317 = por %p315, %p316
      %p318 = scmp.ne.s32.totalorder %s307, %s310
      %p319 = scmp.eq.s32.totalorder %s30, 1
      %p320 = por %p318, %p319
      %p321 = scmp.ne.s32.totalorder %s310, %s311
      %p322 = scmp.eq.s32.totalorder %s30, 0
      %p323 = por %p321, %p322
      %p324 = scmp.ne.s32.totalorder %s310, %s311
      %p325 = scmp.eq.s32.totalorder %s31, 1
      %p326 = por %p324, %p325
      %p328 = scmp.ne.s32.totalorder %s311, %s327
      %p329 = scmp.eq.s32.totalorder %s31, 0
      %p330 = por %p328, %p329
      %p331 = scmp.le.s32.totalorder 1, %s25
      %p332 = scmp.lt.s32.totalorder %s25, 3
      %p333 = pnand %p331, %p332
      %p334 = pneg %p333
      // Predicated region
      $region9: #{tpu_custom_call.1} parent=5 // pred_check
        _
      $region10: #{tpu_custom_call.1} parent=5 // pred_check_branch
        %336 = sbr.rel (%p333) target = $region12
      $region11: #{tpu_custom_call.1} parent=5 // pred_region
        %s337 = ssub.s32 %s25, 1
        // Predicated region
        $region13: #{tpu_custom_call.1} parent=11 // pred_check
          %p338 = pneg %p124
        $region14: #{tpu_custom_call.1} parent=11 // pred_check_branch
          %340 = sbr.rel (%p338) target = $region16
        $region15: #{tpu_custom_call.1} parent=11 // pred_region
          _
        $region16: #{tpu_custom_call.1} parent=11 // pred_fallthru
          _
        // Predicated region
        $region17: #{tpu_custom_call.1} parent=11 // pred_check
          %p341 = pneg %p145
        $region18: #{tpu_custom_call.1} parent=11 // pred_check_branch
          %343 = sbr.rel (%p341) target = $region20
        $region19: #{tpu_custom_call.1} parent=11 // pred_region
          _
        $region20: #{tpu_custom_call.1} parent=11 // pred_fallthru
          _
        // Predicated region
        $region21: #{tpu_custom_call.1} parent=11 // pred_check
          %p344 = pneg %p166
        $region22: #{tpu_custom_call.1} parent=11 // pred_check_branch
          %346 = sbr.rel (%p344) target = $region24
        $region23: #{tpu_custom_call.1} parent=11 // pred_region
          _
        $region24: #{tpu_custom_call.1} parent=11 // pred_fallthru
          _
        // Predicated region
        $region25: #{tpu_custom_call.1} parent=11 // pred_check
          %p347 = pneg %p187
        $region26: #{tpu_custom_call.1} parent=11 // pred_check_branch
          %349 = sbr.rel (%p347) target = $region28
        $region27: #{tpu_custom_call.1} parent=11 // pred_region
          _
        $region28: #{tpu_custom_call.1} parent=11 // pred_fallthru
          _
        // Predicated region
        $region29: #{tpu_custom_call.1} parent=11 // pred_check
          %p350 = pneg %p208
        $region30: #{tpu_custom_call.1} parent=11 // pred_check_branch
          %352 = sbr.rel (%p350) target = $region32
        $region31: #{tpu_custom_call.1} parent=11 // pred_region
          _
        $region32: #{tpu_custom_call.1} parent=11 // pred_fallthru
          _
        // Predicated region
        $region33: #{tpu_custom_call.1} parent=11 // pred_check
          %p353 = pneg %p229
        $region34: #{tpu_custom_call.1} parent=11 // pred_check_branch
          %355 = sbr.rel (%p353) target = $region36
        $region35: #{tpu_custom_call.1} parent=11 // pred_region
          _
        $region36: #{tpu_custom_call.1} parent=11 // pred_fallthru
          _
        // Predicated region
        $region37: #{tpu_custom_call.1} parent=11 // pred_check
          %p356 = pneg %p250
        $region38: #{tpu_custom_call.1} parent=11 // pred_check_branch
          %358 = sbr.rel (%p356) target = $region40
        $region39: #{tpu_custom_call.1} parent=11 // pred_region
          _
        $region40: #{tpu_custom_call.1} parent=11 // pred_fallthru
          _
        // Predicated region
        $region41: #{tpu_custom_call.1} parent=11 // pred_check
          %p359 = pneg %p271
        $region42: #{tpu_custom_call.1} parent=11 // pred_check_branch
          %361 = sbr.rel (%p359) target = $region44
        $region43: #{tpu_custom_call.1} parent=11 // pred_region
          _
        $region44: #{tpu_custom_call.1} parent=11 // pred_fallthru
          _
      $region12: #{tpu_custom_call.1} parent=5 // pred_fallthru
        _
      %p362 = scmp.lt.s32.totalorder %s25, 2
      // Predicated region
      $region45: #{tpu_custom_call.1} parent=5 // pred_check
        %p363 = pneg %p362
      $region46: #{tpu_custom_call.1} parent=5 // pred_check_branch
        %365 = sbr.rel (%p363) target = $region48
      $region47: #{tpu_custom_call.1} parent=5 // pred_region
        // Predicated region
        $region49: #{tpu_custom_call.1} parent=47 // pred_check
          %p366 = pneg %p45
        $region50: #{tpu_custom_call.1} parent=47 // pred_check_branch
          %368 = sbr.rel (%p366) target = $region52
        $region51: #{tpu_custom_call.1} parent=47 // pred_region
          %p369 = scmp.lt.s32.totalorder %s25, 1
          %s370 = scalar_select %p369, %s25, 1
          %s371 = smul.addr %s370, 8
          %s372 = scalar_lea.vmem %s0, %s371
        $region52: #{tpu_custom_call.1} parent=47 // pred_fallthru
          _
        // Predicated region
        $region53: #{tpu_custom_call.1} parent=47 // pred_check
          %p373 = pneg %p71
        $region54: #{tpu_custom_call.1} parent=47 // pred_check_branch
          %375 = sbr.rel (%p373) target = $region56
        $region55: #{tpu_custom_call.1} parent=47 // pred_region
          %p376 = scmp.lt.s32.totalorder %s25, 1
          %s377 = scalar_select %p376, %s25, 1
          %s378 = smul.addr %s377, 8
          %s379 = scalar_lea.vmem %s1, %s378
        $region56: #{tpu_custom_call.1} parent=47 // pred_fallthru
          _
        // Predicated region
        $region57: #{tpu_custom_call.1} parent=47 // pred_check
          %p380 = pneg %p97
        $region58: #{tpu_custom_call.1} parent=47 // pred_check_branch
          %382 = sbr.rel (%p380) target = $region60
        $region59: #{tpu_custom_call.1} parent=47 // pred_region
          %p383 = scmp.lt.s32.totalorder %s25, 1
          %s384 = scalar_select %p383, %s25, 1
          %s385 = smul.addr %s384, 8
          %s386 = scalar_lea.vmem %s2, %s385
        $region60: #{tpu_custom_call.1} parent=47 // pred_fallthru
          _
      $region48: #{tpu_custom_call.1} parent=5 // pred_fallthru
        _
      %p387 = scmp.le.s32.totalorder 1, %s25
      %p388 = scmp.lt.s32.totalorder %s25, 3
      %p389 = pnand %p387, %p388
      %p390 = pneg %p389
      // Predicated region
      $region61: #{tpu_custom_call.1} parent=5 // pred_check
        _
      $region62: #{tpu_custom_call.1} parent=5 // pred_check_branch
        %392 = sbr.rel (%p389) target = $region64
      $region63: #{tpu_custom_call.1} parent=5 // pred_region
        %s393 = ssub.s32 %s25, 1
        %p394 = scmp.lt.s32.totalorder %s30, 1
        %s395 = scalar_select %p394, %s30, 1
        %s396 = smul.addr %s395, 8
        %s397 = scalar_lea.vmem %s0, %s396
        %p398 = pneg %p51
        %p399 = pneg %p48
        %p400 = scmp.lt.s32.totalorder %s30, 1
        %s401 = scalar_select %p400, %s30, 1
        %s402 = smul.addr %s401, 8
        %s403 = scalar_lea.vmem %s1, %s402
        %p404 = pneg %p77
        %p405 = pneg %p74
        %p406 = scmp.lt.s32.totalorder %s30, 1
        %s407 = scalar_select %p406, %s30, 1
        %s408 = smul.addr %s407, 8
        %s409 = scalar_lea.vmem %s2, %s408
        %p410 = pneg %p103
        %p411 = pneg %p100
        %p412 = pneg %p124
        %p413 = pneg %p121
        %p414 = pneg %p145
        %p415 = pneg %p142
        %p416 = pneg %p166
        %p417 = pneg %p163
        %p418 = pneg %p187
        %p419 = pneg %p184
        %p420 = pneg %p208
        %p421 = pneg %p205
        %p422 = pneg %p229
        %p423 = pneg %p226
        %p424 = pneg %p250
        %p425 = pneg %p247
        %p426 = pneg %p271
        %p427 = pneg %p268
        %p428 = pneg %p297
        %p429 = pneg %p294
        %s430 = sand.u32 %s284, 1
        %s431 = scalar_lea.sflag [#allocation3], %s430
        %s432 = sand.u32 %s284, 1
        %s433 = smul.addr %s432, 8
        %s434 = scalar_lea.vmem [#allocation2], %s433
        %p435 = pneg %p323
        %p436 = pneg %p320
        %s437 = sand.u32 %s310, 1
        %s438 = scalar_lea.sflag [#allocation5], %s437
        %s439 = sand.u32 %s310, 1
        %s440 = smul.addr %s439, 24
        %s441 = scalar_lea.vmem [#allocation4], %s440
        %p442 = scmp.lt.s32.totalorder %s30, 1
        %s443 = scalar_select %p442, %s30, 1
        %s444 = smul.addr %s443, 8
        %s445 = scalar_lea.vmem %s0, %s444
        %p446 = scmp.lt.s32.totalorder %s30, 1
        %s447 = scalar_select %p446, %s30, 1
        %s448 = smul.addr %s447, 8
        %s449 = scalar_lea.vmem %s1, %s448
        %p450 = scmp.lt.s32.totalorder %s30, 1
        %s451 = scalar_select %p450, %s30, 1
        %s452 = smul.addr %s451, 8
        %s453 = scalar_lea.vmem %s2, %s452
        %v454 = vld [vmem:[%s445] sm:$0xff]
        %v455 = vld [vmem:[%s449] sm:$0xff]
        %v456 = vld [vmem:[%s453] sm:$0xff]
        %v457 = vld [vmem:[%s10] sm:$0x1]
        %v459 = vlaneseq
        %v460 = vshrl.u32 %v459, 7
        %v461 = vsub.s32 0, %v460
        %v462 = vrot.slane %v457, %v461
        %v464 = vld [vmem:[%s3] sm:$0xff]
        %v465 = vld [vmem:[%s3 + $0x8] sm:$0xff]
        %v466 = vld [vmem:[%s3 + $0x10] sm:$0xff]
        %v467 = vld [vmem:[%s3 + $0x18] sm:$0xff]
        %v468 = vld [vmem:[%s3 + $0x20] sm:$0xff]
        %v469 = vld [vmem:[%s3 + $0x28] sm:$0xff]
        %v470 = vld [vmem:[%s4] sm:$0x1]
        %v472 = vlaneseq
        %v473 = vshrl.u32 %v472, 7
        %v474 = vsub.s32 0, %v473
        %v475 = vrot.slane %v470, %v474
        %vm477 = vcmask 392192
        %v479 = vsel %vm477, %v454, 0
        %481 = vmatprep.subr.mxu0 0.0
        %482 = vmatpush1.msra.mxu0 %v464
        %483 = vmatprep.subr.mxu0 0.0
        %484 = vmatpush1.msra.mxu0 %v465
        %485 = vmatprep.subr.mxu0 0.0
        %486 = vmatpush1.msra.mxu0 %v466
        %487 = vmatprep.subr.mxu0 0.0
        %488 = vmatpush1.msra.mxu0 %v467
        %489 = vmatprep.subr.mxu0 0.0
        %490 = vmatpush1.msra.mxu0 %v468
        %491 = vmatprep.subr.mxu0 0.0
        %492 = vmatpush1.msra.mxu0 %v469
        %493 = vmatprep.subr.mxu0 0.0
        %494 = vmatpush1.msra.mxu0 0.0
        %495 = vmatprep.subr.mxu0 0.0
        %496 = vmatpush1.msra.mxu0 0.0
        %497 = vmatprep.subr.mxu0 0.0
        %498 = vmatpush1.msra.mxu0 0.0
        %499 = vmatprep.subr.mxu0 0.0
        %500 = vmatpush1.msra.mxu0 0.0
        %501 = vmatprep.subr.mxu0 0.0
        %502 = vmatpush1.msra.mxu0 0.0
        %503 = vmatprep.subr.mxu0 0.0
        %504 = vmatpush1.msra.mxu0 0.0
        %505 = vmatprep.subr.mxu0 0.0
        %506 = vmatpush1.msra.mxu0 0.0
        %507 = vmatprep.subr.mxu0 0.0
        %508 = vmatpush1.msra.mxu0 0.0
        %509 = vmatprep.subr.mxu0 0.0
        %510 = vmatpush1.msra.mxu0 0.0
        %511 = vmatprep.subr.mxu0 0.0
        %512 = vmatpush1.msra.mxu0 0.0
        %513 = vmatprep.subr.mxu0 0.0
        %514 = vmatpush1.msra.mxu0 0.0
        %515 = vmatprep.subr.mxu0 0.0
        %516 = vmatpush1.msra.mxu0 0.0
        %517 = vmatprep.subr.mxu0 0.0
        %518 = vmatpush1.msra.mxu0 0.0
        %519 = vmatprep.subr.mxu0 0.0
        %520 = vmatpush1.msra.mxu0 0.0
        %521 = vmatprep.subr.mxu0 0.0
        %522 = vmatpush1.msra.mxu0 0.0
        %523 = vmatprep.subr.mxu0 0.0
        %524 = vmatpush1.msra.mxu0 0.0
        %525 = vmatprep.subr.mxu0 0.0
        %526 = vmatpush1.msra.mxu0 0.0
        %527 = vmatprep.subr.mxu0 0.0
        %528 = vmatpush1.msra.mxu0 0.0
        %529 = vmatprep.subr.mxu0 0.0
        %530 = vmatpush1.msra.mxu0 0.0
        %531 = vmatprep.subr.mxu0 0.0
        %532 = vmatpush1.msra.mxu0 0.0
        %533 = vmatprep.subr.mxu0 0.0
        %534 = vmatpush1.msra.mxu0 0.0
        %535 = vmatprep.subr.mxu0 0.0
        %536 = vmatpush1.msra.mxu0 0.0
        %537 = vmatprep.subr.mxu0 0.0
        %538 = vmatpush1.msra.mxu0 0.0
        %539 = vmatprep.subr.mxu0 0.0
        %540 = vmatpush1.msra.mxu0 0.0
        %541 = vmatprep.subr.mxu0 0.0
        %542 = vmatpush1.msra.mxu0 0.0
        %543 = vmatprep.subr.mxu0 0.0
        %544 = vmatpush1.msra.mxu0 0.0
        %545 = vmatprep.mubr.f32.mxu0 0.0
        %546 = vmatmul.mubr.f32.gmra.mrb[0].mxu0 %v479
        %v547 = vpop.f32.mrb[0].mxu0
        %v548 = vadd.f32 %v475, %v547
        %v549 = vpop.f32.mrb[0].mxu0
        %550 = vdwg.mxu0
        %v551 = vld [vmem:[%s5] sm:$0xff]
        %v552 = vld [vmem:[%s5 + $0x8] sm:$0xff]
        %v553 = vld [vmem:[%s5 + $0x10] sm:$0xff]
        %v554 = vld [vmem:[%s5 + $0x18] sm:$0xff]
        %v555 = vld [vmem:[%s5 + $0x20] sm:$0xff]
        %v556 = vld [vmem:[%s5 + $0x28] sm:$0xff]
        %v557 = vld [vmem:[%s6] sm:$0x1]
        %v559 = vlaneseq
        %v560 = vshrl.u32 %v559, 7
        %v561 = vsub.s32 0, %v560
        %v562 = vrot.slane %v557, %v561
        %v565 = vsel %vm477, %v455, 0
        %567 = vmatprep.subr.mxu0 0.0
        %568 = vmatpush1.msra.mxu0 %v551
        %569 = vmatprep.subr.mxu0 0.0
        %570 = vmatpush1.msra.mxu0 %v552
        %571 = vmatprep.subr.mxu0 0.0
        %572 = vmatpush1.msra.mxu0 %v553
        %573 = vmatprep.subr.mxu0 0.0
        %574 = vmatpush1.msra.mxu0 %v554
        %575 = vmatprep.subr.mxu0 0.0
        %576 = vmatpush1.msra.mxu0 %v555
        %577 = vmatprep.subr.mxu0 0.0
        %578 = vmatpush1.msra.mxu0 %v556
        %579 = vmatprep.subr.mxu0 0.0
        %580 = vmatpush1.msra.mxu0 0.0
        %581 = vmatprep.subr.mxu0 0.0
        %582 = vmatpush1.msra.mxu0 0.0
        %583 = vmatprep.subr.mxu0 0.0
        %584 = vmatpush1.msra.mxu0 0.0
        %585 = vmatprep.subr.mxu0 0.0
        %586 = vmatpush1.msra.mxu0 0.0
        %587 = vmatprep.subr.mxu0 0.0
        %588 = vmatpush1.msra.mxu0 0.0
        %589 = vmatprep.subr.mxu0 0.0
        %590 = vmatpush1.msra.mxu0 0.0
        %591 = vmatprep.subr.mxu0 0.0
        %592 = vmatpush1.msra.mxu0 0.0
        %593 = vmatprep.subr.mxu0 0.0
        %594 = vmatpush1.msra.mxu0 0.0
        %595 = vmatprep.subr.mxu0 0.0
        %596 = vmatpush1.msra.mxu0 0.0
        %597 = vmatprep.subr.mxu0 0.0
        %598 = vmatpush1.msra.mxu0 0.0
        %599 = vmatprep.subr.mxu0 0.0
        %600 = vmatpush1.msra.mxu0 0.0
        %601 = vmatprep.subr.mxu0 0.0
        %602 = vmatpush1.msra.mxu0 0.0
        %603 = vmatprep.subr.mxu0 0.0
        %604 = vmatpush1.msra.mxu0 0.0
        %605 = vmatprep.subr.mxu0 0.0
        %606 = vmatpush1.msra.mxu0 0.0
        %607 = vmatprep.subr.mxu0 0.0
        %608 = vmatpush1.msra.mxu0 0.0
        %609 = vmatprep.subr.mxu0 0.0
        %610 = vmatpush1.msra.mxu0 0.0
        %611 = vmatprep.subr.mxu0 0.0
        %612 = vmatpush1.msra.mxu0 0.0
        %613 = vmatprep.subr.mxu0 0.0
        %614 = vmatpush1.msra.mxu0 0.0
        %615 = vmatprep.subr.mxu0 0.0
        %616 = vmatpush1.msra.mxu0 0.0
        %617 = vmatprep.subr.mxu0 0.0
        %618 = vmatpush1.msra.mxu0 0.0
        %619 = vmatprep.subr.mxu0 0.0
        %620 = vmatpush1.msra.mxu0 0.0
        %621 = vmatprep.subr.mxu0 0.0
        %622 = vmatpush1.msra.mxu0 0.0
        %623 = vmatprep.subr.mxu0 0.0
        %624 = vmatpush1.msra.mxu0 0.0
        %625 = vmatprep.subr.mxu0 0.0
        %626 = vmatpush1.msra.mxu0 0.0
        %627 = vmatprep.subr.mxu0 0.0
        %628 = vmatpush1.msra.mxu0 0.0
        %629 = vmatprep.subr.mxu0 0.0
        %630 = vmatpush1.msra.mxu0 0.0
        %631 = vmatprep.mubr.f32.mxu0 0.0
        %632 = vmatmul.mubr.f32.gmra.mrb[0].mxu0 %v565
        %v633 = vpop.f32.mrb[0].mxu0
        %v634 = vadd.f32 %v562, %v633
        %v635 = vpop.f32.mrb[0].mxu0
        %636 = vdwg.mxu0
        %v637 = vld [vmem:[%s7] sm:$0xff]
        %v638 = vld [vmem:[%s7 + $0x8] sm:$0xff]
        %v639 = vld [vmem:[%s7 + $0x10] sm:$0xff]
        %v640 = vld [vmem:[%s7 + $0x18] sm:$0xff]
        %v641 = vld [vmem:[%s7 + $0x20] sm:$0xff]
        %v642 = vld [vmem:[%s7 + $0x28] sm:$0xff]
        %v643 = vld [vmem:[%s8] sm:$0x1]
        %v645 = vlaneseq
        %v646 = vshrl.u32 %v645, 7
        %v647 = vsub.s32 0, %v646
        %v648 = vrot.slane %v643, %v647
        %v651 = vsel %vm477, %v456, 0
        %653 = vmatprep.subr.mxu0 0.0
        %654 = vmatpush1.msra.mxu0 %v637
        %655 = vmatprep.subr.mxu0 0.0
        %656 = vmatpush1.msra.mxu0 %v638
        %657 = vmatprep.subr.mxu0 0.0
        %658 = vmatpush1.msra.mxu0 %v639
        %659 = vmatprep.subr.mxu0 0.0
        %660 = vmatpush1.msra.mxu0 %v640
        %661 = vmatprep.subr.mxu0 0.0
        %662 = vmatpush1.msra.mxu0 %v641
        %663 = vmatprep.subr.mxu0 0.0
        %664 = vmatpush1.msra.mxu0 %v642
        %665 = vmatprep.subr.mxu0 0.0
        %666 = vmatpush1.msra.mxu0 0.0
        %667 = vmatprep.subr.mxu0 0.0
        %668 = vmatpush1.msra.mxu0 0.0
        %669 = vmatprep.subr.mxu0 0.0
        %670 = vmatpush1.msra.mxu0 0.0
        %671 = vmatprep.subr.mxu0 0.0
        %672 = vmatpush1.msra.mxu0 0.0
        %673 = vmatprep.subr.mxu0 0.0
        %674 = vmatpush1.msra.mxu0 0.0
        %675 = vmatprep.subr.mxu0 0.0
        %676 = vmatpush1.msra.mxu0 0.0
        %677 = vmatprep.subr.mxu0 0.0
        %678 = vmatpush1.msra.mxu0 0.0
        %679 = vmatprep.subr.mxu0 0.0
        %680 = vmatpush1.msra.mxu0 0.0
        %681 = vmatprep.subr.mxu0 0.0
        %682 = vmatpush1.msra.mxu0 0.0
        %683 = vmatprep.subr.mxu0 0.0
        %684 = vmatpush1.msra.mxu0 0.0
        %685 = vmatprep.subr.mxu0 0.0
        %686 = vmatpush1.msra.mxu0 0.0
        %687 = vmatprep.subr.mxu0 0.0
        %688 = vmatpush1.msra.mxu0 0.0
        %689 = vmatprep.subr.mxu0 0.0
        %690 = vmatpush1.msra.mxu0 0.0
        %691 = vmatprep.subr.mxu0 0.0
        %692 = vmatpush1.msra.mxu0 0.0
        %693 = vmatprep.subr.mxu0 0.0
        %694 = vmatpush1.msra.mxu0 0.0
        %695 = vmatprep.subr.mxu0 0.0
        %696 = vmatpush1.msra.mxu0 0.0
        %697 = vmatprep.subr.mxu0 0.0
        %698 = vmatpush1.msra.mxu0 0.0
        %699 = vmatprep.subr.mxu0 0.0
        %700 = vmatpush1.msra.mxu0 0.0
        %701 = vmatprep.subr.mxu0 0.0
        %702 = vmatpush1.msra.mxu0 0.0
        %703 = vmatprep.subr.mxu0 0.0
        %704 = vmatpush1.msra.mxu0 0.0
        %705 = vmatprep.subr.mxu0 0.0
        %706 = vmatpush1.msra.mxu0 0.0
        %707 = vmatprep.subr.mxu0 0.0
        %708 = vmatpush1.msra.mxu0 0.0
        %709 = vmatprep.subr.mxu0 0.0
        %710 = vmatpush1.msra.mxu0 0.0
        %711 = vmatprep.subr.mxu0 0.0
        %712 = vmatpush1.msra.mxu0 0.0
        %713 = vmatprep.subr.mxu0 0.0
        %714 = vmatpush1.msra.mxu0 0.0
        %715 = vmatprep.subr.mxu0 0.0
        %716 = vmatpush1.msra.mxu0 0.0
        %717 = vmatprep.mubr.f32.mxu0 0.0
        %718 = vmatmul.mubr.f32.gmra.mrb[0].mxu0 %v651
        %v719 = vpop.f32.mrb[0].mxu0
        %v720 = vadd.f32 %v648, %v719
        %v721 = vpop.f32.mrb[0].mxu0
        %722 = vdwg.mxu0
        %vm723 = vcmask 130048
        %v725 = vsel %vm723, %v548, 0
        %v728 = vsel %vm723, %v634, 0
        %730 = vmatprep.subr.mxu0 0.0
        %731 = vmatpush1.xpose.msra.mxu0 %v728
        %732 = vmatprep.subr.mxu0 0.0
        %733 = vmatpush1.xpose.msra.mxu0 0.0
        %734 = vmatprep.subr.mxu0 0.0
        %735 = vmatpush1.xpose.msra.mxu0 0.0
        %736 = vmatprep.subr.mxu0 0.0
        %737 = vmatpush1.xpose.msra.mxu0 0.0
        %738 = vmatprep.subr.mxu0 0.0
        %739 = vmatpush1.xpose.msra.mxu0 0.0
        %740 = vmatprep.subr.mxu0 0.0
        %741 = vmatpush1.xpose.msra.mxu0 0.0
        %742 = vmatprep.subr.mxu0 0.0
        %743 = vmatpush1.xpose.msra.mxu0 0.0
        %744 = vmatprep.subr.mxu0 0.0
        %745 = vmatpush1.xpose.msra.mxu0 0.0
        %746 = vmatprep.subr.mxu0 0.0
        %747 = vmatpush1.xpose.msra.mxu0 0.0
        %748 = vmatprep.subr.mxu0 0.0
        %749 = vmatpush1.xpose.msra.mxu0 0.0
        %750 = vmatprep.subr.mxu0 0.0
        %751 = vmatpush1.xpose.msra.mxu0 0.0
        %752 = vmatprep.subr.mxu0 0.0
        %753 = vmatpush1.xpose.msra.mxu0 0.0
        %754 = vmatprep.subr.mxu0 0.0
        %755 = vmatpush1.xpose.msra.mxu0 0.0
        %756 = vmatprep.subr.mxu0 0.0
        %757 = vmatpush1.xpose.msra.mxu0 0.0
        %758 = vmatprep.subr.mxu0 0.0
        %759 = vmatpush1.xpose.msra.mxu0 0.0
        %760 = vmatprep.subr.mxu0 0.0
        %761 = vmatpush1.xpose.msra.mxu0 0.0
        %762 = vmatprep.subr.mxu0 0.0
        %763 = vmatpush1.xpose.msra.mxu0 0.0
        %764 = vmatprep.subr.mxu0 0.0
        %765 = vmatpush1.xpose.msra.mxu0 0.0
        %766 = vmatprep.subr.mxu0 0.0
        %767 = vmatpush1.xpose.msra.mxu0 0.0
        %768 = vmatprep.subr.mxu0 0.0
        %769 = vmatpush1.xpose.msra.mxu0 0.0
        %770 = vmatprep.subr.mxu0 0.0
        %771 = vmatpush1.xpose.msra.mxu0 0.0
        %772 = vmatprep.subr.mxu0 0.0
        %773 = vmatpush1.xpose.msra.mxu0 0.0
        %774 = vmatprep.subr.mxu0 0.0
        %775 = vmatpush1.xpose.msra.mxu0 0.0
        %776 = vmatprep.subr.mxu0 0.0
        %777 = vmatpush1.xpose.msra.mxu0 0.0
        %778 = vmatprep.subr.mxu0 0.0
        %779 = vmatpush1.xpose.msra.mxu0 0.0
        %780 = vmatprep.subr.mxu0 0.0
        %781 = vmatpush1.xpose.msra.mxu0 0.0
        %782 = vmatprep.subr.mxu0 0.0
        %783 = vmatpush1.xpose.msra.mxu0 0.0
        %784 = vmatprep.subr.mxu0 0.0
        %785 = vmatpush1.xpose.msra.mxu0 0.0
        %786 = vmatprep.subr.mxu0 0.0
        %787 = vmatpush1.xpose.msra.mxu0 0.0
        %788 = vmatprep.subr.mxu0 0.0
        %789 = vmatpush1.xpose.msra.mxu0 0.0
        %790 = vmatprep.subr.mxu0 0.0
        %791 = vmatpush1.xpose.msra.mxu0 0.0
        %792 = vmatprep.subr.mxu0 0.0
        %793 = vmatpush1.xpose.msra.mxu0 0.0
        %794 = vmatprep.mubr.f32.mxu0 0.0
        %795 = vmatmul.mubr.f32.gmra.mrb[0].mxu0 %v725
        %v796 = vpop.f32.mrb[0].mxu0
        %v797 = vadd.f32 0.0, %v796
        %v798 = vpop.f32.mrb[0].mxu0
        %799 = vdwg.mxu0
        %vm800 = vcmask 64512
        %v801 = vsel %vm800, %v797, -inf
        %802 = vmax.xlane.f32.xlu0 %v801
        %v803 = vpop.xlane.xlu0 %802
        %v804 = vsub.f32 %v797, %v803
        %v805 = vmul.f32 %v804, 1.442695
        %v806 = vpow.pop %v805
        %v807 = vsel %vm800, %v806, 0.0
        %808 = vadd.xlane.f32.xlu0 %v807
        %v809 = vpop.xlane.xlu0 %808
        %v810 = vrcp.pop %v809
        %v811 = vmul.f32 %v806, %v810
        %812 = vst.msk [vmem:[%s441] sm:$0xff] %vm800, %v811
        %v814 = vsel %vm800, %v811, 0
        %816 = vmatprep.subr.mxu0 0.0
        %817 = vmatpush1.msra.mxu0 %v720
        %818 = vmatprep.subr.mxu0 0.0
        %819 = vmatpush1.msra.mxu0 0.0
        %820 = vmatprep.subr.mxu0 0.0
        %821 = vmatpush1.msra.mxu0 0.0
        %822 = vmatprep.subr.mxu0 0.0
        %823 = vmatpush1.msra.mxu0 0.0
        %824 = vmatprep.subr.mxu0 0.0
        %825 = vmatpush1.msra.mxu0 0.0
        %826 = vmatprep.subr.mxu0 0.0
        %827 = vmatpush1.msra.mxu0 0.0
        %828 = vmatprep.subr.mxu0 0.0
        %829 = vmatpush1.msra.mxu0 0.0
        %830 = vmatprep.subr.mxu0 0.0
        %831 = vmatpush1.msra.mxu0 0.0
        %832 = vmatprep.subr.mxu0 0.0
        %833 = vmatpush1.msra.mxu0 0.0
        %834 = vmatprep.subr.mxu0 0.0
        %835 = vmatpush1.msra.mxu0 0.0
        %836 = vmatprep.subr.mxu0 0.0
        %837 = vmatpush1.msra.mxu0 0.0
        %838 = vmatprep.subr.mxu0 0.0
        %839 = vmatpush1.msra.mxu0 0.0
        %840 = vmatprep.subr.mxu0 0.0
        %841 = vmatpush1.msra.mxu0 0.0
        %842 = vmatprep.subr.mxu0 0.0
        %843 = vmatpush1.msra.mxu0 0.0
        %844 = vmatprep.subr.mxu0 0.0
        %845 = vmatpush1.msra.mxu0 0.0
        %846 = vmatprep.subr.mxu0 0.0
        %847 = vmatpush1.msra.mxu0 0.0
        %848 = vmatprep.subr.mxu0 0.0
        %849 = vmatpush1.msra.mxu0 0.0
        %850 = vmatprep.subr.mxu0 0.0
        %851 = vmatpush1.msra.mxu0 0.0
        %852 = vmatprep.subr.mxu0 0.0
        %853 = vmatpush1.msra.mxu0 0.0
        %854 = vmatprep.subr.mxu0 0.0
        %855 = vmatpush1.msra.mxu0 0.0
        %856 = vmatprep.subr.mxu0 0.0
        %857 = vmatpush1.msra.mxu0 0.0
        %858 = vmatprep.subr.mxu0 0.0
        %859 = vmatpush1.msra.mxu0 0.0
        %860 = vmatprep.subr.mxu0 0.0
        %861 = vmatpush1.msra.mxu0 0.0
        %862 = vmatprep.subr.mxu0 0.0
        %863 = vmatpush1.msra.mxu0 0.0
        %864 = vmatprep.subr.mxu0 0.0
        %865 = vmatpush1.msra.mxu0 0.0
        %866 = vmatprep.subr.mxu0 0.0
        %867 = vmatpush1.msra.mxu0 0.0
        %868 = vmatprep.subr.mxu0 0.0
        %869 = vmatpush1.msra.mxu0 0.0
        %870 = vmatprep.subr.mxu0 0.0
        %871 = vmatpush1.msra.mxu0 0.0
        %872 = vmatprep.subr.mxu0 0.0
        %873 = vmatpush1.msra.mxu0 0.0
        %874 = vmatprep.subr.mxu0 0.0
        %875 = vmatpush1.msra.mxu0 0.0
        %876 = vmatprep.subr.mxu0 0.0
        %877 = vmatpush1.msra.mxu0 0.0
        %878 = vmatprep.subr.mxu0 0.0
        %879 = vmatpush1.msra.mxu0 0.0
        %880 = vmatprep.mubr.f32.mxu0 0.0
        %881 = vmatmul.mubr.f32.gmra.mrb[0].mxu0 %v814
        %v882 = vpop.f32.mrb[0].mxu0
        %v883 = vadd.f32 0.0, %v882
        %v884 = vpop.f32.mrb[0].mxu0
        %885 = vdwg.mxu0
        %v886 = vld [vmem:[%s9] sm:$0xff]
        %v887 = vld [vmem:[%s9 + $0x8] sm:$0xff]
        %v889 = vsel %vm723, %v883, 0
        %891 = vmatprep.subr.mxu0 0.0
        %892 = vmatpush1.msra.mxu0 %v886
        %893 = vmatprep.subr.mxu0 0.0
        %894 = vmatpush1.msra.mxu0 %v887
        %895 = vmatprep.subr.mxu0 0.0
        %896 = vmatpush1.msra.mxu0 0.0
        %897 = vmatprep.subr.mxu0 0.0
        %898 = vmatpush1.msra.mxu0 0.0
        %899 = vmatprep.subr.mxu0 0.0
        %900 = vmatpush1.msra.mxu0 0.0
        %901 = vmatprep.subr.mxu0 0.0
        %902 = vmatpush1.msra.mxu0 0.0
        %903 = vmatprep.subr.mxu0 0.0
        %904 = vmatpush1.msra.mxu0 0.0
        %905 = vmatprep.subr.mxu0 0.0
        %906 = vmatpush1.msra.mxu0 0.0
        %907 = vmatprep.subr.mxu0 0.0
        %908 = vmatpush1.msra.mxu0 0.0
        %909 = vmatprep.subr.mxu0 0.0
        %910 = vmatpush1.msra.mxu0 0.0
        %911 = vmatprep.subr.mxu0 0.0
        %912 = vmatpush1.msra.mxu0 0.0
        %913 = vmatprep.subr.mxu0 0.0
        %914 = vmatpush1.msra.mxu0 0.0
        %915 = vmatprep.subr.mxu0 0.0
        %916 = vmatpush1.msra.mxu0 0.0
        %917 = vmatprep.subr.mxu0 0.0
        %918 = vmatpush1.msra.mxu0 0.0
        %919 = vmatprep.subr.mxu0 0.0
        %920 = vmatpush1.msra.mxu0 0.0
        %921 = vmatprep.subr.mxu0 0.0
        %922 = vmatpush1.msra.mxu0 0.0
        %923 = vmatprep.subr.mxu0 0.0
        %924 = vmatpush1.msra.mxu0 0.0
        %925 = vmatprep.subr.mxu0 0.0
        %926 = vmatpush1.msra.mxu0 0.0
        %927 = vmatprep.subr.mxu0 0.0
        %928 = vmatpush1.msra.mxu0 0.0
        %929 = vmatprep.subr.mxu0 0.0
        %930 = vmatpush1.msra.mxu0 0.0
        %931 = vmatprep.subr.mxu0 0.0
        %932 = vmatpush1.msra.mxu0 0.0
        %933 = vmatprep.subr.mxu0 0.0
        %934 = vmatpush1.msra.mxu0 0.0
        %935 = vmatprep.subr.mxu0 0.0
        %936 = vmatpush1.msra.mxu0 0.0
        %937 = vmatprep.subr.mxu0 0.0
        %938 = vmatpush1.msra.mxu0 0.0
        %939 = vmatprep.subr.mxu0 0.0
        %940 = vmatpush1.msra.mxu0 0.0
        %941 = vmatprep.subr.mxu0 0.0
        %942 = vmatpush1.msra.mxu0 0.0
        %943 = vmatprep.subr.mxu0 0.0
        %944 = vmatpush1.msra.mxu0 0.0
        %945 = vmatprep.subr.mxu0 0.0
        %946 = vmatpush1.msra.mxu0 0.0
        %947 = vmatprep.subr.mxu0 0.0
        %948 = vmatpush1.msra.mxu0 0.0
        %949 = vmatprep.subr.mxu0 0.0
        %950 = vmatpush1.msra.mxu0 0.0
        %951 = vmatprep.subr.mxu0 0.0
        %952 = vmatpush1.msra.mxu0 0.0
        %953 = vmatprep.subr.mxu0 0.0
        %954 = vmatpush1.msra.mxu0 0.0
        %955 = vmatprep.mubr.f32.mxu0 0.0
        %956 = vmatmul.mubr.f32.gmra.mrb[0].mxu0 %v889
        %v957 = vpop.f32.mrb[0].mxu0
        %v958 = vadd.f32 0.0, %v957
        %v959 = vpop.f32.mrb[0].mxu0
        %960 = vdwg.mxu0
        %v961 = vadd.f32 %v462, %v958
        %s962 = scalar_lea.vmem %s3, 48
        %v963 = vld [vmem:[%s962] sm:$0xff]
        %v964 = vld [vmem:[%s962 + $0x8] sm:$0xff]
        %v965 = vld [vmem:[%s962 + $0x10] sm:$0xff]
        %v966 = vld [vmem:[%s962 + $0x18] sm:$0xff]
        %v967 = vld [vmem:[%s962 + $0x20] sm:$0xff]
        %v968 = vld [vmem:[%s962 + $0x28] sm:$0xff]
        %s969 = scalar_lea.vmem %s4, 1
        %v970 = vld [vmem:[%s969] sm:$0x1]
        %v972 = vlaneseq
        %v973 = vshrl.u32 %v972, 7
        %v974 = vsub.s32 0, %v973
        %v975 = vrot.slane %v970, %v974
        %977 = vmatprep.subr.mxu0 0.0
        %978 = vmatpush1.msra.mxu0 %v963
        %979 = vmatprep.subr.mxu0 0.0
        %980 = vmatpush1.msra.mxu0 %v964
        %981 = vmatprep.subr.mxu0 0.0
        %982 = vmatpush1.msra.mxu0 %v965
        %983 = vmatprep.subr.mxu0 0.0
        %984 = vmatpush1.msra.mxu0 %v966
        %985 = vmatprep.subr.mxu0 0.0
        %986 = vmatpush1.msra.mxu0 %v967
        %987 = vmatprep.subr.mxu0 0.0
        %988 = vmatpush1.msra.mxu0 %v968
        %989 = vmatprep.subr.mxu0 0.0
        %990 = vmatpush1.msra.mxu0 0.0
        %991 = vmatprep.subr.mxu0 0.0
        %992 = vmatpush1.msra.mxu0 0.0
        %993 = vmatprep.subr.mxu0 0.0
        %994 = vmatpush1.msra.mxu0 0.0
        %995 = vmatprep.subr.mxu0 0.0
        %996 = vmatpush1.msra.mxu0 0.0
        %997 = vmatprep.subr.mxu0 0.0
        %998 = vmatpush1.msra.mxu0 0.0
        %999 = vmatprep.subr.mxu0 0.0
        %1000 = vmatpush1.msra.mxu0 0.0
        %1001 = vmatprep.subr.mxu0 0.0
        %1002 = vmatpush1.msra.mxu0 0.0
        %1003 = vmatprep.subr.mxu0 0.0
        %1004 = vmatpush1.msra.mxu0 0.0
        %1005 = vmatprep.subr.mxu0 0.0
        %1006 = vmatpush1.msra.mxu0 0.0
        %1007 = vmatprep.subr.mxu0 0.0
        %1008 = vmatpush1.msra.mxu0 0.0
        %1009 = vmatprep.subr.mxu0 0.0
        %1010 = vmatpush1.msra.mxu0 0.0
        %1011 = vmatprep.subr.mxu0 0.0
        %1012 = vmatpush1.msra.mxu0 0.0
        %1013 = vmatprep.subr.mxu0 0.0
        %1014 = vmatpush1.msra.mxu0 0.0
        %1015 = vmatprep.subr.mxu0 0.0
        %1016 = vmatpush1.msra.mxu0 0.0
        %1017 = vmatprep.subr.mxu0 0.0
        %1018 = vmatpush1.msra.mxu0 0.0
        %1019 = vmatprep.subr.mxu0 0.0
        %1020 = vmatpush1.msra.mxu0 0.0
        %1021 = vmatprep.subr.mxu0 0.0
        %1022 = vmatpush1.msra.mxu0 0.0
        %1023 = vmatprep.subr.mxu0 0.0
        %1024 = vmatpush1.msra.mxu0 0.0
        %1025 = vmatprep.subr.mxu0 0.0
        %1026 = vmatpush1.msra.mxu0 0.0
        %1027 = vmatprep.subr.mxu0 0.0
        %1028 = vmatpush1.msra.mxu0 0.0
        %1029 = vmatprep.subr.mxu0 0.0
        %1030 = vmatpush1.msra.mxu0 0.0
        %1031 = vmatprep.subr.mxu0 0.0
        %1032 = vmatpush1.msra.mxu0 0.0
        %1033 = vmatprep.subr.mxu0 0.0
        %1034 = vmatpush1.msra.mxu0 0.0
        %1035 = vmatprep.subr.mxu0 0.0
        %1036 = vmatpush1.msra.mxu0 0.0
        %1037 = vmatprep.subr.mxu0 0.0
        %1038 = vmatpush1.msra.mxu0 0.0
        %1039 = vmatprep.subr.mxu0 0.0
        %1040 = vmatpush1.msra.mxu0 0.0
        %1041 = vmatprep.mubr.f32.mxu0 0.0
        %1042 = vmatmul.mubr.f32.gmra.mrb[0].mxu0 %v479
        %v1043 = vpop.f32.mrb[0].mxu0
        %v1044 = vadd.f32 %v975, %v1043
        %v1045 = vpop.f32.mrb[0].mxu0
        %1046 = vdwg.mxu0
        %s1047 = scalar_lea.vmem %s5, 48
        %v1048 = vld [vmem:[%s1047] sm:$0xff]
        %v1049 = vld [vmem:[%s1047 + $0x8] sm:$0xff]
        %v1050 = vld [vmem:[%s1047 + $0x10] sm:$0xff]
        %v1051 = vld [vmem:[%s1047 + $0x18] sm:$0xff]
        %v1052 = vld [vmem:[%s1047 + $0x20] sm:$0xff]
        %v1053 = vld [vmem:[%s1047 + $0x28] sm:$0xff]
        %s1054 = scalar_lea.vmem %s6, 1
        %v1055 = vld [vmem:[%s1054] sm:$0x1]
        %v1057 = vlaneseq
        %v1058 = vshrl.u32 %v1057, 7
        %v1059 = vsub.s32 0, %v1058
        %v1060 = vrot.slane %v1055, %v1059
        %1062 = vmatprep.subr.mxu0 0.0
        %1063 = vmatpush1.msra.mxu0 %v1048
        %1064 = vmatprep.subr.mxu0 0.0
        %1065 = vmatpush1.msra.mxu0 %v1049
        %1066 = vmatprep.subr.mxu0 0.0
        %1067 = vmatpush1.msra.mxu0 %v1050
        %1068 = vmatprep.subr.mxu0 0.0
        %1069 = vmatpush1.msra.mxu0 %v1051
        %1070 = vmatprep.subr.mxu0 0.0
        %1071 = vmatpush1.msra.mxu0 %v1052
        %1072 = vmatprep.subr.mxu0 0.0
        %1073 = vmatpush1.msra.mxu0 %v1053
        %1074 = vmatprep.subr.mxu0 0.0
        %1075 = vmatpush1.msra.mxu0 0.0
        %1076 = vmatprep.subr.mxu0 0.0
        %1077 = vmatpush1.msra.mxu0 0.0
        %1078 = vmatprep.subr.mxu0 0.0
        %1079 = vmatpush1.msra.mxu0 0.0
        %1080 = vmatprep.subr.mxu0 0.0
        %1081 = vmatpush1.msra.mxu0 0.0
        %1082 = vmatprep.subr.mxu0 0.0
        %1083 = vmatpush1.msra.mxu0 0.0
        %1084 = vmatprep.subr.mxu0 0.0
        %1085 = vmatpush1.msra.mxu0 0.0
        %1086 = vmatprep.subr.mxu0 0.0
        %1087 = vmatpush1.msra.mxu0 0.0
        %1088 = vmatprep.subr.mxu0 0.0
        %1089 = vmatpush1.msra.mxu0 0.0
        %1090 = vmatprep.subr.mxu0 0.0
        %1091 = vmatpush1.msra.mxu0 0.0
        %1092 = vmatprep.subr.mxu0 0.0
        %1093 = vmatpush1.msra.mxu0 0.0
        %1094 = vmatprep.subr.mxu0 0.0
        %1095 = vmatpush1.msra.mxu0 0.0
        %1096 = vmatprep.subr.mxu0 0.0
        %1097 = vmatpush1.msra.mxu0 0.0
        %1098 = vmatprep.subr.mxu0 0.0
        %1099 = vmatpush1.msra.mxu0 0.0
        %1100 = vmatprep.subr.mxu0 0.0
        %1101 = vmatpush1.msra.mxu0 0.0
        %1102 = vmatprep.subr.mxu0 0.0
        %1103 = vmatpush1.msra.mxu0 0.0
        %1104 = vmatprep.subr.mxu0 0.0
        %1105 = vmatpush1.msra.mxu0 0.0
        %1106 = vmatprep.subr.mxu0 0.0
        %1107 = vmatpush1.msra.mxu0 0.0
        %1108 = vmatprep.subr.mxu0 0.0
        %1109 = vmatpush1.msra.mxu0 0.0
        %1110 = vmatprep.subr.mxu0 0.0
        %1111 = vmatpush1.msra.mxu0 0.0
        %1112 = vmatprep.subr.mxu0 0.0
        %1113 = vmatpush1.msra.mxu0 0.0
        %1114 = vmatprep.subr.mxu0 0.0
        %1115 = vmatpush1.msra.mxu0 0.0
        %1116 = vmatprep.subr.mxu0 0.0
        %1117 = vmatpush1.msra.mxu0 0.0
        %1118 = vmatprep.subr.mxu0 0.0
        %1119 = vmatpush1.msra.mxu0 0.0
        %1120 = vmatprep.subr.mxu0 0.0
        %1121 = vmatpush1.msra.mxu0 0.0
        %1122 = vmatprep.subr.mxu0 0.0
        %1123 = vmatpush1.msra.mxu0 0.0
        %1124 = vmatprep.subr.mxu0 0.0
        %1125 = vmatpush1.msra.mxu0 0.0
        %1126 = vmatprep.mubr.f32.mxu0 0.0
        %1127 = vmatmul.mubr.f32.gmra.mrb[0].mxu0 %v565
        %v1128 = vpop.f32.mrb[0].mxu0
        %v1129 = vadd.f32 %v1060, %v1128
        %v1130 = vpop.f32.mrb[0].mxu0
        %1131 = vdwg.mxu0
        %s1132 = scalar_lea.vmem %s7, 48
        %v1133 = vld [vmem:[%s1132] sm:$0xff]
        %v1134 = vld [vmem:[%s1132 + $0x8] sm:$0xff]
        %v1135 = vld [vmem:[%s1132 + $0x10] sm:$0xff]
        %v1136 = vld [vmem:[%s1132 + $0x18] sm:$0xff]
        %v1137 = vld [vmem:[%s1132 + $0x20] sm:$0xff]
        %v1138 = vld [vmem:[%s1132 + $0x28] sm:$0xff]
        %s1139 = scalar_lea.vmem %s8, 1
        %v1140 = vld [vmem:[%s1139] sm:$0x1]
        %v1142 = vlaneseq
        %v1143 = vshrl.u32 %v1142, 7
        %v1144 = vsub.s32 0, %v1143
        %v1145 = vrot.slane %v1140, %v1144
        %1147 = vmatprep.subr.mxu0 0.0
        %1148 = vmatpush1.msra.mxu0 %v1133
        %1149 = vmatprep.subr.mxu0 0.0
        %1150 = vmatpush1.msra.mxu0 %v1134
        %1151 = vmatprep.subr.mxu0 0.0
        %1152 = vmatpush1.msra.mxu0 %v1135
        %1153 = vmatprep.subr.mxu0 0.0
        %1154 = vmatpush1.msra.mxu0 %v1136
        %1155 = vmatprep.subr.mxu0 0.0
        %1156 = vmatpush1.msra.mxu0 %v1137
        %1157 = vmatprep.subr.mxu0 0.0
        %1158 = vmatpush1.msra.mxu0 %v1138
        %1159 = vmatprep.subr.mxu0 0.0
        %1160 = vmatpush1.msra.mxu0 0.0
        %1161 = vmatprep.subr.mxu0 0.0
        %1162 = vmatpush1.msra.mxu0 0.0
        %1163 = vmatprep.subr.mxu0 0.0
        %1164 = vmatpush1.msra.mxu0 0.0
        %1165 = vmatprep.subr.mxu0 0.0
        %1166 = vmatpush1.msra.mxu0 0.0
        %1167 = vmatprep.subr.mxu0 0.0
        %1168 = vmatpush1.msra.mxu0 0.0
        %1169 = vmatprep.subr.mxu0 0.0
        %1170 = vmatpush1.msra.mxu0 0.0
        %1171 = vmatprep.subr.mxu0 0.0
        %1172 = vmatpush1.msra.mxu0 0.0
        %1173 = vmatprep.subr.mxu0 0.0
        %1174 = vmatpush1.msra.mxu0 0.0
        %1175 = vmatprep.subr.mxu0 0.0
        %1176 = vmatpush1.msra.mxu0 0.0
        %1177 = vmatprep.subr.mxu0 0.0
        %1178 = vmatpush1.msra.mxu0 0.0
        %1179 = vmatprep.subr.mxu0 0.0
        %1180 = vmatpush1.msra.mxu0 0.0
        %1181 = vmatprep.subr.mxu0 0.0
        %1182 = vmatpush1.msra.mxu0 0.0
        %1183 = vmatprep.subr.mxu0 0.0
        %1184 = vmatpush1.msra.mxu0 0.0
        %1185 = vmatprep.subr.mxu0 0.0
        %1186 = vmatpush1.msra.mxu0 0.0
        %1187 = vmatprep.subr.mxu0 0.0
        %1188 = vmatpush1.msra.mxu0 0.0
        %1189 = vmatprep.subr.mxu0 0.0
        %1190 = vmatpush1.msra.mxu0 0.0
        %1191 = vmatprep.subr.mxu0 0.0
        %1192 = vmatpush1.msra.mxu0 0.0
        %1193 = vmatprep.subr.mxu0 0.0
        %1194 = vmatpush1.msra.mxu0 0.0
        %1195 = vmatprep.subr.mxu0 0.0
        %1196 = vmatpush1.msra.mxu0 0.0
        %1197 = vmatprep.subr.mxu0 0.0
        %1198 = vmatpush1.msra.mxu0 0.0
        %1199 = vmatprep.subr.mxu0 0.0
        %1200 = vmatpush1.msra.mxu0 0.0
        %1201 = vmatprep.subr.mxu0 0.0
        %1202 = vmatpush1.msra.mxu0 0.0
        %1203 = vmatprep.subr.mxu0 0.0
        %1204 = vmatpush1.msra.mxu0 0.0
        %1205 = vmatprep.subr.mxu0 0.0
        %1206 = vmatpush1.msra.mxu0 0.0
        %1207 = vmatprep.subr.mxu0 0.0
        %1208 = vmatpush1.msra.mxu0 0.0
        %1209 = vmatprep.subr.mxu0 0.0
        %1210 = vmatpush1.msra.mxu0 0.0
        %1211 = vmatprep.mubr.f32.mxu0 0.0
        %1212 = vmatmul.mubr.f32.gmra.mrb[0].mxu0 %v651
        %v1213 = vpop.f32.mrb[0].mxu0
        %v1214 = vadd.f32 %v1145, %v1213
        %v1215 = vpop.f32.mrb[0].mxu0
        %1216 = vdwg.mxu0
        %v1218 = vsel %vm723, %v1044, 0
        %v1221 = vsel %vm723, %v1129, 0
        %1223 = vmatprep.subr.mxu0 0.0
        %1224 = vmatpush1.xpose.msra.mxu0 %v1221
        %1225 = vmatprep.subr.mxu0 0.0
        %1226 = vmatpush1.xpose.msra.mxu0 0.0
        %1227 = vmatprep.subr.mxu0 0.0
        %1228 = vmatpush1.xpose.msra.mxu0 0.0
        %1229 = vmatprep.subr.mxu0 0.0
        %1230 = vmatpush1.xpose.msra.mxu0 0.0
        %1231 = vmatprep.subr.mxu0 0.0
        %1232 = vmatpush1.xpose.msra.mxu0 0.0
        %1233 = vmatprep.subr.mxu0 0.0
        %1234 = vmatpush1.xpose.msra.mxu0 0.0
        %1235 = vmatprep.subr.mxu0 0.0
        %1236 = vmatpush1.xpose.msra.mxu0 0.0
        %1237 = vmatprep.subr.mxu0 0.0
        %1238 = vmatpush1.xpose.msra.mxu0 0.0
        %1239 = vmatprep.subr.mxu0 0.0
        %1240 = vmatpush1.xpose.msra.mxu0 0.0
        %1241 = vmatprep.subr.mxu0 0.0
        %1242 = vmatpush1.xpose.msra.mxu0 0.0
        %1243 = vmatprep.subr.mxu0 0.0
        %1244 = vmatpush1.xpose.msra.mxu0 0.0
        %1245 = vmatprep.subr.mxu0 0.0
        %1246 = vmatpush1.xpose.msra.mxu0 0.0
        %1247 = vmatprep.subr.mxu0 0.0
        %1248 = vmatpush1.xpose.msra.mxu0 0.0
        %1249 = vmatprep.subr.mxu0 0.0
        %1250 = vmatpush1.xpose.msra.mxu0 0.0
        %1251 = vmatprep.subr.mxu0 0.0
        %1252 = vmatpush1.xpose.msra.mxu0 0.0
        %1253 = vmatprep.subr.mxu0 0.0
        %1254 = vmatpush1.xpose.msra.mxu0 0.0
        %1255 = vmatprep.subr.mxu0 0.0
        %1256 = vmatpush1.xpose.msra.mxu0 0.0
        %1257 = vmatprep.subr.mxu0 0.0
        %1258 = vmatpush1.xpose.msra.mxu0 0.0
        %1259 = vmatprep.subr.mxu0 0.0
        %1260 = vmatpush1.xpose.msra.mxu0 0.0
        %1261 = vmatprep.subr.mxu0 0.0
        %1262 = vmatpush1.xpose.msra.mxu0 0.0
        %1263 = vmatprep.subr.mxu0 0.0
        %1264 = vmatpush1.xpose.msra.mxu0 0.0
        %1265 = vmatprep.subr.mxu0 0.0
        %1266 = vmatpush1.xpose.msra.mxu0 0.0
        %1267 = vmatprep.subr.mxu0 0.0
        %1268 = vmatpush1.xpose.msra.mxu0 0.0
        %1269 = vmatprep.subr.mxu0 0.0
        %1270 = vmatpush1.xpose.msra.mxu0 0.0
        %1271 = vmatprep.subr.mxu0 0.0
        %1272 = vmatpush1.xpose.msra.mxu0 0.0
        %1273 = vmatprep.subr.mxu0 0.0
        %1274 = vmatpush1.xpose.msra.mxu0 0.0
        %1275 = vmatprep.subr.mxu0 0.0
        %1276 = vmatpush1.xpose.msra.mxu0 0.0
        %1277 = vmatprep.subr.mxu0 0.0
        %1278 = vmatpush1.xpose.msra.mxu0 0.0
        %1279 = vmatprep.subr.mxu0 0.0
        %1280 = vmatpush1.xpose.msra.mxu0 0.0
        %1281 = vmatprep.subr.mxu0 0.0
        %1282 = vmatpush1.xpose.msra.mxu0 0.0
        %1283 = vmatprep.subr.mxu0 0.0
        %1284 = vmatpush1.xpose.msra.mxu0 0.0
        %1285 = vmatprep.subr.mxu0 0.0
        %1286 = vmatpush1.xpose.msra.mxu0 0.0
        %1287 = vmatprep.mubr.f32.mxu0 0.0
        %1288 = vmatmul.mubr.f32.gmra.mrb[0].mxu0 %v1218
        %v1289 = vpop.f32.mrb[0].mxu0
        %v1290 = vadd.f32 0.0, %v1289
        %v1291 = vpop.f32.mrb[0].mxu0
        %1292 = vdwg.mxu0
        %v1293 = vsel %vm800, %v1290, -inf
        %1294 = vmax.xlane.f32.xlu0 %v1293
        %v1295 = vpop.xlane.xlu0 %1294
        %v1296 = vsub.f32 %v1290, %v1295
        %v1297 = vmul.f32 %v1296, 1.442695
        %v1298 = vpow.pop %v1297
        %v1299 = vsel %vm800, %v1298, 0.0
        %1300 = vadd.xlane.f32.xlu0 %v1299
        %v1301 = vpop.xlane.xlu0 %1300
        %v1302 = vrcp.pop %v1301
        %v1303 = vmul.f32 %v1298, %v1302
        %s1304 = scalar_lea.vmem %s441, 8 [#allocation4]
        %1305 = vst.msk [vmem:[%s1304] sm:$0xff] %vm800, %v1303
        %v1307 = vsel %vm800, %v1303, 0
        %1309 = vmatprep.subr.mxu0 0.0
        %1310 = vmatpush1.msra.mxu0 %v1214
        %1311 = vmatprep.subr.mxu0 0.0
        %1312 = vmatpush1.msra.mxu0 0.0
        %1313 = vmatprep.subr.mxu0 0.0
        %1314 = vmatpush1.msra.mxu0 0.0
        %1315 = vmatprep.subr.mxu0 0.0
        %1316 = vmatpush1.msra.mxu0 0.0
        %1317 = vmatprep.subr.mxu0 0.0
        %1318 = vmatpush1.msra.mxu0 0.0
        %1319 = vmatprep.subr.mxu0 0.0
        %1320 = vmatpush1.msra.mxu0 0.0
        %1321 = vmatprep.subr.mxu0 0.0
        %1322 = vmatpush1.msra.mxu0 0.0
        %1323 = vmatprep.subr.mxu0 0.0
        %1324 = vmatpush1.msra.mxu0 0.0
        %1325 = vmatprep.subr.mxu0 0.0
        %1326 = vmatpush1.msra.mxu0 0.0
        %1327 = vmatprep.subr.mxu0 0.0
        %1328 = vmatpush1.msra.mxu0 0.0
        %1329 = vmatprep.subr.mxu0 0.0
        %1330 = vmatpush1.msra.mxu0 0.0
        %1331 = vmatprep.subr.mxu0 0.0
        %1332 = vmatpush1.msra.mxu0 0.0
        %1333 = vmatprep.subr.mxu0 0.0
        %1334 = vmatpush1.msra.mxu0 0.0
        %1335 = vmatprep.subr.mxu0 0.0
        %1336 = vmatpush1.msra.mxu0 0.0
        %1337 = vmatprep.subr.mxu0 0.0
        %1338 = vmatpush1.msra.mxu0 0.0
        %1339 = vmatprep.subr.mxu0 0.0
        %1340 = vmatpush1.msra.mxu0 0.0
        %1341 = vmatprep.subr.mxu0 0.0
        %1342 = vmatpush1.msra.mxu0 0.0
        %1343 = vmatprep.subr.mxu0 0.0
        %1344 = vmatpush1.msra.mxu0 0.0
        %1345 = vmatprep.subr.mxu0 0.0
        %1346 = vmatpush1.msra.mxu0 0.0
        %1347 = vmatprep.subr.mxu0 0.0
        %1348 = vmatpush1.msra.mxu0 0.0
        %1349 = vmatprep.subr.mxu0 0.0
        %1350 = vmatpush1.msra.mxu0 0.0
        %1351 = vmatprep.subr.mxu0 0.0
        %1352 = vmatpush1.msra.mxu0 0.0
        %1353 = vmatprep.subr.mxu0 0.0
        %1354 = vmatpush1.msra.mxu0 0.0
        %1355 = vmatprep.subr.mxu0 0.0
        %1356 = vmatpush1.msra.mxu0 0.0
        %1357 = vmatprep.subr.mxu0 0.0
        %1358 = vmatpush1.msra.mxu0 0.0
        %1359 = vmatprep.subr.mxu0 0.0
        %1360 = vmatpush1.msra.mxu0 0.0
        %1361 = vmatprep.subr.mxu0 0.0
        %1362 = vmatpush1.msra.mxu0 0.0
        %1363 = vmatprep.subr.mxu0 0.0
        %1364 = vmatpush1.msra.mxu0 0.0
        %1365 = vmatprep.subr.mxu0 0.0
        %1366 = vmatpush1.msra.mxu0 0.0
        %1367 = vmatprep.subr.mxu0 0.0
        %1368 = vmatpush1.msra.mxu0 0.0
        %1369 = vmatprep.subr.mxu0 0.0
        %1370 = vmatpush1.msra.mxu0 0.0
        %1371 = vmatprep.subr.mxu0 0.0
        %1372 = vmatpush1.msra.mxu0 0.0
        %1373 = vmatprep.mubr.f32.mxu0 0.0
        %1374 = vmatmul.mubr.f32.gmra.mrb[0].mxu0 %v1307
        %v1375 = vpop.f32.mrb[0].mxu0
        %v1376 = vadd.f32 0.0, %v1375
        %v1377 = vpop.f32.mrb[0].mxu0
        %1378 = vdwg.mxu0
        %s1379 = scalar_lea.vmem %s9, 16
        %v1380 = vld [vmem:[%s1379] sm:$0xff]
        %v1381 = vld [vmem:[%s1379 + $0x8] sm:$0xff]
        %v1383 = vsel %vm723, %v1376, 0
        %1385 = vmatprep.subr.mxu0 0.0
        %1386 = vmatpush1.msra.mxu0 %v1380
        %1387 = vmatprep.subr.mxu0 0.0
        %1388 = vmatpush1.msra.mxu0 %v1381
        %1389 = vmatprep.subr.mxu0 0.0
        %1390 = vmatpush1.msra.mxu0 0.0
        %1391 = vmatprep.subr.mxu0 0.0
        %1392 = vmatpush1.msra.mxu0 0.0
        %1393 = vmatprep.subr.mxu0 0.0
        %1394 = vmatpush1.msra.mxu0 0.0
        %1395 = vmatprep.subr.mxu0 0.0
        %1396 = vmatpush1.msra.mxu0 0.0
        %1397 = vmatprep.subr.mxu0 0.0
        %1398 = vmatpush1.msra.mxu0 0.0
        %1399 = vmatprep.subr.mxu0 0.0
        %1400 = vmatpush1.msra.mxu0 0.0
        %1401 = vmatprep.subr.mxu0 0.0
        %1402 = vmatpush1.msra.mxu0 0.0
        %1403 = vmatprep.subr.mxu0 0.0
        %1404 = vmatpush1.msra.mxu0 0.0
        %1405 = vmatprep.subr.mxu0 0.0
        %1406 = vmatpush1.msra.mxu0 0.0
        %1407 = vmatprep.subr.mxu0 0.0
        %1408 = vmatpush1.msra.mxu0 0.0
        %1409 = vmatprep.subr.mxu0 0.0
        %1410 = vmatpush1.msra.mxu0 0.0
        %1411 = vmatprep.subr.mxu0 0.0
        %1412 = vmatpush1.msra.mxu0 0.0
        %1413 = vmatprep.subr.mxu0 0.0
        %1414 = vmatpush1.msra.mxu0 0.0
        %1415 = vmatprep.subr.mxu0 0.0
        %1416 = vmatpush1.msra.mxu0 0.0
        %1417 = vmatprep.subr.mxu0 0.0
        %1418 = vmatpush1.msra.mxu0 0.0
        %1419 = vmatprep.subr.mxu0 0.0
        %1420 = vmatpush1.msra.mxu0 0.0
        %1421 = vmatprep.subr.mxu0 0.0
        %1422 = vmatpush1.msra.mxu0 0.0
        %1423 = vmatprep.subr.mxu0 0.0
        %1424 = vmatpush1.msra.mxu0 0.0
        %1425 = vmatprep.subr.mxu0 0.0
        %1426 = vmatpush1.msra.mxu0 0.0
        %1427 = vmatprep.subr.mxu0 0.0
        %1428 = vmatpush1.msra.mxu0 0.0
        %1429 = vmatprep.subr.mxu0 0.0
        %1430 = vmatpush1.msra.mxu0 0.0
        %1431 = vmatprep.subr.mxu0 0.0
        %1432 = vmatpush1.msra.mxu0 0.0
        %1433 = vmatprep.subr.mxu0 0.0
        %1434 = vmatpush1.msra.mxu0 0.0
        %1435 = vmatprep.subr.mxu0 0.0
        %1436 = vmatpush1.msra.mxu0 0.0
        %1437 = vmatprep.subr.mxu0 0.0
        %1438 = vmatpush1.msra.mxu0 0.0
        %1439 = vmatprep.subr.mxu0 0.0
        %1440 = vmatpush1.msra.mxu0 0.0
        %1441 = vmatprep.subr.mxu0 0.0
        %1442 = vmatpush1.msra.mxu0 0.0
        %1443 = vmatprep.subr.mxu0 0.0
        %1444 = vmatpush1.msra.mxu0 0.0
        %1445 = vmatprep.subr.mxu0 0.0
        %1446 = vmatpush1.msra.mxu0 0.0
        %1447 = vmatprep.subr.mxu0 0.0
        %1448 = vmatpush1.msra.mxu0 0.0
        %1449 = vmatprep.mubr.f32.mxu0 0.0
        %1450 = vmatmul.mubr.f32.gmra.mrb[0].mxu0 %v1383
        %v1451 = vpop.f32.mrb[0].mxu0
        %v1452 = vadd.f32 0.0, %v1451
        %v1453 = vpop.f32.mrb[0].mxu0
        %1454 = vdwg.mxu0
        %v1455 = vadd.f32 %v961, %v1452
        %s1456 = scalar_lea.vmem %s3, 96
        %v1457 = vld [vmem:[%s1456] sm:$0xff]
        %v1458 = vld [vmem:[%s1456 + $0x8] sm:$0xff]
        %v1459 = vld [vmem:[%s1456 + $0x10] sm:$0xff]
        %v1460 = vld [vmem:[%s1456 + $0x18] sm:$0xff]
        %v1461 = vld [vmem:[%s1456 + $0x20] sm:$0xff]
        %v1462 = vld [vmem:[%s1456 + $0x28] sm:$0xff]
        %s1463 = scalar_lea.vmem %s4, 2
        %v1464 = vld [vmem:[%s1463] sm:$0x1]
        %v1466 = vlaneseq
        %v1467 = vshrl.u32 %v1466, 7
        %v1468 = vsub.s32 0, %v1467
        %v1469 = vrot.slane %v1464, %v1468
        %1471 = vmatprep.subr.mxu0 0.0
        %1472 = vmatpush1.msra.mxu0 %v1457
        %1473 = vmatprep.subr.mxu0 0.0
        %1474 = vmatpush1.msra.mxu0 %v1458
        %1475 = vmatprep.subr.mxu0 0.0
        %1476 = vmatpush1.msra.mxu0 %v1459
        %1477 = vmatprep.subr.mxu0 0.0
        %1478 = vmatpush1.msra.mxu0 %v1460
        %1479 = vmatprep.subr.mxu0 0.0
        %1480 = vmatpush1.msra.mxu0 %v1461
        %1481 = vmatprep.subr.mxu0 0.0
        %1482 = vmatpush1.msra.mxu0 %v1462
        %1483 = vmatprep.subr.mxu0 0.0
        %1484 = vmatpush1.msra.mxu0 0.0
        %1485 = vmatprep.subr.mxu0 0.0
        %1486 = vmatpush1.msra.mxu0 0.0
        %1487 = vmatprep.subr.mxu0 0.0
        %1488 = vmatpush1.msra.mxu0 0.0
        %1489 = vmatprep.subr.mxu0 0.0
        %1490 = vmatpush1.msra.mxu0 0.0
        %1491 = vmatprep.subr.mxu0 0.0
        %1492 = vmatpush1.msra.mxu0 0.0
        %1493 = vmatprep.subr.mxu0 0.0
        %1494 = vmatpush1.msra.mxu0 0.0
        %1495 = vmatprep.subr.mxu0 0.0
        %1496 = vmatpush1.msra.mxu0 0.0
        %1497 = vmatprep.subr.mxu0 0.0
        %1498 = vmatpush1.msra.mxu0 0.0
        %1499 = vmatprep.subr.mxu0 0.0
        %1500 = vmatpush1.msra.mxu0 0.0
        %1501 = vmatprep.subr.mxu0 0.0
        %1502 = vmatpush1.msra.mxu0 0.0
        %1503 = vmatprep.subr.mxu0 0.0
        %1504 = vmatpush1.msra.mxu0 0.0
        %1505 = vmatprep.subr.mxu0 0.0
        %1506 = vmatpush1.msra.mxu0 0.0
        %1507 = vmatprep.subr.mxu0 0.0
        %1508 = vmatpush1.msra.mxu0 0.0
        %1509 = vmatprep.subr.mxu0 0.0
        %1510 = vmatpush1.msra.mxu0 0.0
        %1511 = vmatprep.subr.mxu0 0.0
        %1512 = vmatpush1.msra.mxu0 0.0
        %1513 = vmatprep.subr.mxu0 0.0
        %1514 = vmatpush1.msra.mxu0 0.0
        %1515 = vmatprep.subr.mxu0 0.0
        %1516 = vmatpush1.msra.mxu0 0.0
        %1517 = vmatprep.subr.mxu0 0.0
        %1518 = vmatpush1.msra.mxu0 0.0
        %1519 = vmatprep.subr.mxu0 0.0
        %1520 = vmatpush1.msra.mxu0 0.0
        %1521 = vmatprep.subr.mxu0 0.0
        %1522 = vmatpush1.msra.mxu0 0.0
        %1523 = vmatprep.subr.mxu0 0.0
        %1524 = vmatpush1.msra.mxu0 0.0
        %1525 = vmatprep.subr.mxu0 0.0
        %1526 = vmatpush1.msra.mxu0 0.0
        %1527 = vmatprep.subr.mxu0 0.0
        %1528 = vmatpush1.msra.mxu0 0.0
        %1529 = vmatprep.subr.mxu0 0.0
        %1530 = vmatpush1.msra.mxu0 0.0
        %1531 = vmatprep.subr.mxu0 0.0
        %1532 = vmatpush1.msra.mxu0 0.0
        %1533 = vmatprep.subr.mxu0 0.0
        %1534 = vmatpush1.msra.mxu0 0.0
        %1535 = vmatprep.mubr.f32.mxu0 0.0
        %1536 = vmatmul.mubr.f32.gmra.mrb[0].mxu0 %v479
        %v1537 = vpop.f32.mrb[0].mxu0
        %v1538 = vadd.f32 %v1469, %v1537
        %v1539 = vpop.f32.mrb[0].mxu0
        %1540 = vdwg.mxu0
        %s1541 = scalar_lea.vmem %s5, 96
        %v1542 = vld [vmem:[%s1541] sm:$0xff]
        %v1543 = vld [vmem:[%s1541 + $0x8] sm:$0xff]
        %v1544 = vld [vmem:[%s1541 + $0x10] sm:$0xff]
        %v1545 = vld [vmem:[%s1541 + $0x18] sm:$0xff]
        %v1546 = vld [vmem:[%s1541 + $0x20] sm:$0xff]
        %v1547 = vld [vmem:[%s1541 + $0x28] sm:$0xff]
        %s1548 = scalar_lea.vmem %s6, 2
        %v1549 = vld [vmem:[%s1548] sm:$0x1]
        %v1551 = vlaneseq
        %v1552 = vshrl.u32 %v1551, 7
        %v1553 = vsub.s32 0, %v1552
        %v1554 = vrot.slane %v1549, %v1553
        %1556 = vmatprep.subr.mxu0 0.0
        %1557 = vmatpush1.msra.mxu0 %v1542
        %1558 = vmatprep.subr.mxu0 0.0
        %1559 = vmatpush1.msra.mxu0 %v1543
        %1560 = vmatprep.subr.mxu0 0.0
        %1561 = vmatpush1.msra.mxu0 %v1544
        %1562 = vmatprep.subr.mxu0 0.0
        %1563 = vmatpush1.msra.mxu0 %v1545
        %1564 = vmatprep.subr.mxu0 0.0
        %1565 = vmatpush1.msra.mxu0 %v1546
        %1566 = vmatprep.subr.mxu0 0.0
        %1567 = vmatpush1.msra.mxu0 %v1547
        %1568 = vmatprep.subr.mxu0 0.0
        %1569 = vmatpush1.msra.mxu0 0.0
        %1570 = vmatprep.subr.mxu0 0.0
        %1571 = vmatpush1.msra.mxu0 0.0
        %1572 = vmatprep.subr.mxu0 0.0
        %1573 = vmatpush1.msra.mxu0 0.0
        %1574 = vmatprep.subr.mxu0 0.0
        %1575 = vmatpush1.msra.mxu0 0.0
        %1576 = vmatprep.subr.mxu0 0.0
        %1577 = vmatpush1.msra.mxu0 0.0
        %1578 = vmatprep.subr.mxu0 0.0
        %1579 = vmatpush1.msra.mxu0 0.0
        %1580 = vmatprep.subr.mxu0 0.0
        %1581 = vmatpush1.msra.mxu0 0.0
        %1582 = vmatprep.subr.mxu0 0.0
        %1583 = vmatpush1.msra.mxu0 0.0
        %1584 = vmatprep.subr.mxu0 0.0
        %1585 = vmatpush1.msra.mxu0 0.0
        %1586 = vmatprep.subr.mxu0 0.0
        %1587 = vmatpush1.msra.mxu0 0.0
        %1588 = vmatprep.subr.mxu0 0.0
        %1589 = vmatpush1.msra.mxu0 0.0
        %1590 = vmatprep.subr.mxu0 0.0
        %1591 = vmatpush1.msra.mxu0 0.0
        %1592 = vmatprep.subr.mxu0 0.0
        %1593 = vmatpush1.msra.mxu0 0.0
        %1594 = vmatprep.subr.mxu0 0.0
        %1595 = vmatpush1.msra.mxu0 0.0
        %1596 = vmatprep.subr.mxu0 0.0
        %1597 = vmatpush1.msra.mxu0 0.0
        %1598 = vmatprep.subr.mxu0 0.0
        %1599 = vmatpush1.msra.mxu0 0.0
        %1600 = vmatprep.subr.mxu0 0.0
        %1601 = vmatpush1.msra.mxu0 0.0
        %1602 = vmatprep.subr.mxu0 0.0
        %1603 = vmatpush1.msra.mxu0 0.0
        %1604 = vmatprep.subr.mxu0 0.0
        %1605 = vmatpush1.msra.mxu0 0.0
        %1606 = vmatprep.subr.mxu0 0.0
        %1607 = vmatpush1.msra.mxu0 0.0
        %1608 = vmatprep.subr.mxu0 0.0
        %1609 = vmatpush1.msra.mxu0 0.0
        %1610 = vmatprep.subr.mxu0 0.0
        %1611 = vmatpush1.msra.mxu0 0.0
        %1612 = vmatprep.subr.mxu0 0.0
        %1613 = vmatpush1.msra.mxu0 0.0
        %1614 = vmatprep.subr.mxu0 0.0
        %1615 = vmatpush1.msra.mxu0 0.0
        %1616 = vmatprep.subr.mxu0 0.0
        %1617 = vmatpush1.msra.mxu0 0.0
        %1618 = vmatprep.subr.mxu0 0.0
        %1619 = vmatpush1.msra.mxu0 0.0
        %1620 = vmatprep.mubr.f32.mxu0 0.0
        %1621 = vmatmul.mubr.f32.gmra.mrb[0].mxu0 %v565
        %v1622 = vpop.f32.mrb[0].mxu0
        %v1623 = vadd.f32 %v1554, %v1622
        %v1624 = vpop.f32.mrb[0].mxu0
        %1625 = vdwg.mxu0
        %s1626 = scalar_lea.vmem %s7, 96
        %v1627 = vld [vmem:[%s1626] sm:$0xff]
        %v1628 = vld [vmem:[%s1626 + $0x8] sm:$0xff]
        %v1629 = vld [vmem:[%s1626 + $0x10] sm:$0xff]
        %v1630 = vld [vmem:[%s1626 + $0x18] sm:$0xff]
        %v1631 = vld [vmem:[%s1626 + $0x20] sm:$0xff]
        %v1632 = vld [vmem:[%s1626 + $0x28] sm:$0xff]
        %s1633 = scalar_lea.vmem %s8, 2
        %v1634 = vld [vmem:[%s1633] sm:$0x1]
        %v1636 = vlaneseq
        %v1637 = vshrl.u32 %v1636, 7
        %v1638 = vsub.s32 0, %v1637
        %v1639 = vrot.slane %v1634, %v1638
        %1641 = vmatprep.subr.mxu0 0.0
        %1642 = vmatpush1.msra.mxu0 %v1627
        %1643 = vmatprep.subr.mxu0 0.0
        %1644 = vmatpush1.msra.mxu0 %v1628
        %1645 = vmatprep.subr.mxu0 0.0
        %1646 = vmatpush1.msra.mxu0 %v1629
        %1647 = vmatprep.subr.mxu0 0.0
        %1648 = vmatpush1.msra.mxu0 %v1630
        %1649 = vmatprep.subr.mxu0 0.0
        %1650 = vmatpush1.msra.mxu0 %v1631
        %1651 = vmatprep.subr.mxu0 0.0
        %1652 = vmatpush1.msra.mxu0 %v1632
        %1653 = vmatprep.subr.mxu0 0.0
        %1654 = vmatpush1.msra.mxu0 0.0
        %1655 = vmatprep.subr.mxu0 0.0
        %1656 = vmatpush1.msra.mxu0 0.0
        %1657 = vmatprep.subr.mxu0 0.0
        %1658 = vmatpush1.msra.mxu0 0.0
        %1659 = vmatprep.subr.mxu0 0.0
        %1660 = vmatpush1.msra.mxu0 0.0
        %1661 = vmatprep.subr.mxu0 0.0
        %1662 = vmatpush1.msra.mxu0 0.0
        %1663 = vmatprep.subr.mxu0 0.0
        %1664 = vmatpush1.msra.mxu0 0.0
        %1665 = vmatprep.subr.mxu0 0.0
        %1666 = vmatpush1.msra.mxu0 0.0
        %1667 = vmatprep.subr.mxu0 0.0
        %1668 = vmatpush1.msra.mxu0 0.0
        %1669 = vmatprep.subr.mxu0 0.0
        %1670 = vmatpush1.msra.mxu0 0.0
        %1671 = vmatprep.subr.mxu0 0.0
        %1672 = vmatpush1.msra.mxu0 0.0
        %1673 = vmatprep.subr.mxu0 0.0
        %1674 = vmatpush1.msra.mxu0 0.0
        %1675 = vmatprep.subr.mxu0 0.0
        %1676 = vmatpush1.msra.mxu0 0.0
        %1677 = vmatprep.subr.mxu0 0.0
        %1678 = vmatpush1.msra.mxu0 0.0
        %1679 = vmatprep.subr.mxu0 0.0
        %1680 = vmatpush1.msra.mxu0 0.0
        %1681 = vmatprep.subr.mxu0 0.0
        %1682 = vmatpush1.msra.mxu0 0.0
        %1683 = vmatprep.subr.mxu0 0.0
        %1684 = vmatpush1.msra.mxu0 0.0
        %1685 = vmatprep.subr.mxu0 0.0
        %1686 = vmatpush1.msra.mxu0 0.0
        %1687 = vmatprep.subr.mxu0 0.0
        %1688 = vmatpush1.msra.mxu0 0.0
        %1689 = vmatprep.subr.mxu0 0.0
        %1690 = vmatpush1.msra.mxu0 0.0
        %1691 = vmatprep.subr.mxu0 0.0
        %1692 = vmatpush1.msra.mxu0 0.0
        %1693 = vmatprep.subr.mxu0 0.0
        %1694 = vmatpush1.msra.mxu0 0.0
        %1695 = vmatprep.subr.mxu0 0.0
        %1696 = vmatpush1.msra.mxu0 0.0
        %1697 = vmatprep.subr.mxu0 0.0
        %1698 = vmatpush1.msra.mxu0 0.0
        %1699 = vmatprep.subr.mxu0 0.0
        %1700 = vmatpush1.msra.mxu0 0.0
        %1701 = vmatprep.subr.mxu0 0.0
        %1702 = vmatpush1.msra.mxu0 0.0
        %1703 = vmatprep.subr.mxu0 0.0
        %1704 = vmatpush1.msra.mxu0 0.0
        %1705 = vmatprep.mubr.f32.mxu0 0.0
        %1706 = vmatmul.mubr.f32.gmra.mrb[0].mxu0 %v651
        %v1707 = vpop.f32.mrb[0].mxu0
        %v1708 = vadd.f32 %v1639, %v1707
        %v1709 = vpop.f32.mrb[0].mxu0
        %1710 = vdwg.mxu0
        %v1712 = vsel %vm723, %v1538, 0
        %v1715 = vsel %vm723, %v1623, 0
        %1717 = vmatprep.subr.mxu0 0.0
        %1718 = vmatpush1.xpose.msra.mxu0 %v1715
        %1719 = vmatprep.subr.mxu0 0.0
        %1720 = vmatpush1.xpose.msra.mxu0 0.0
        %1721 = vmatprep.subr.mxu0 0.0
        %1722 = vmatpush1.xpose.msra.mxu0 0.0
        %1723 = vmatprep.subr.mxu0 0.0
        %1724 = vmatpush1.xpose.msra.mxu0 0.0
        %1725 = vmatprep.subr.mxu0 0.0
        %1726 = vmatpush1.xpose.msra.mxu0 0.0
        %1727 = vmatprep.subr.mxu0 0.0
        %1728 = vmatpush1.xpose.msra.mxu0 0.0
        %1729 = vmatprep.subr.mxu0 0.0
        %1730 = vmatpush1.xpose.msra.mxu0 0.0
        %1731 = vmatprep.subr.mxu0 0.0
        %1732 = vmatpush1.xpose.msra.mxu0 0.0
        %1733 = vmatprep.subr.mxu0 0.0
        %1734 = vmatpush1.xpose.msra.mxu0 0.0
        %1735 = vmatprep.subr.mxu0 0.0
        %1736 = vmatpush1.xpose.msra.mxu0 0.0
        %1737 = vmatprep.subr.mxu0 0.0
        %1738 = vmatpush1.xpose.msra.mxu0 0.0
        %1739 = vmatprep.subr.mxu0 0.0
        %1740 = vmatpush1.xpose.msra.mxu0 0.0
        %1741 = vmatprep.subr.mxu0 0.0
        %1742 = vmatpush1.xpose.msra.mxu0 0.0
        %1743 = vmatprep.subr.mxu0 0.0
        %1744 = vmatpush1.xpose.msra.mxu0 0.0
        %1745 = vmatprep.subr.mxu0 0.0
        %1746 = vmatpush1.xpose.msra.mxu0 0.0
        %1747 = vmatprep.subr.mxu0 0.0
        %1748 = vmatpush1.xpose.msra.mxu0 0.0
        %1749 = vmatprep.subr.mxu0 0.0
        %1750 = vmatpush1.xpose.msra.mxu0 0.0
        %1751 = vmatprep.subr.mxu0 0.0
        %1752 = vmatpush1.xpose.msra.mxu0 0.0
        %1753 = vmatprep.subr.mxu0 0.0
        %1754 = vmatpush1.xpose.msra.mxu0 0.0
        %1755 = vmatprep.subr.mxu0 0.0
        %1756 = vmatpush1.xpose.msra.mxu0 0.0
        %1757 = vmatprep.subr.mxu0 0.0
        %1758 = vmatpush1.xpose.msra.mxu0 0.0
        %1759 = vmatprep.subr.mxu0 0.0
        %1760 = vmatpush1.xpose.msra.mxu0 0.0
        %1761 = vmatprep.subr.mxu0 0.0
        %1762 = vmatpush1.xpose.msra.mxu0 0.0
        %1763 = vmatprep.subr.mxu0 0.0
        %1764 = vmatpush1.xpose.msra.mxu0 0.0
        %1765 = vmatprep.subr.mxu0 0.0
        %1766 = vmatpush1.xpose.msra.mxu0 0.0
        %1767 = vmatprep.subr.mxu0 0.0
        %1768 = vmatpush1.xpose.msra.mxu0 0.0
        %1769 = vmatprep.subr.mxu0 0.0
        %1770 = vmatpush1.xpose.msra.mxu0 0.0
        %1771 = vmatprep.subr.mxu0 0.0
        %1772 = vmatpush1.xpose.msra.mxu0 0.0
        %1773 = vmatprep.subr.mxu0 0.0
        %1774 = vmatpush1.xpose.msra.mxu0 0.0
        %1775 = vmatprep.subr.mxu0 0.0
        %1776 = vmatpush1.xpose.msra.mxu0 0.0
        %1777 = vmatprep.subr.mxu0 0.0
        %1778 = vmatpush1.xpose.msra.mxu0 0.0
        %1779 = vmatprep.subr.mxu0 0.0
        %1780 = vmatpush1.xpose.msra.mxu0 0.0
        %1781 = vmatprep.mubr.f32.mxu0 0.0
        %1782 = vmatmul.mubr.f32.gmra.mrb[0].mxu0 %v1712
        %v1783 = vpop.f32.mrb[0].mxu0
        %v1784 = vadd.f32 0.0, %v1783
        %v1785 = vpop.f32.mrb[0].mxu0
        %1786 = vdwg.mxu0
        %v1787 = vsel %vm800, %v1784, -inf
        %1788 = vmax.xlane.f32.xlu0 %v1787
        %v1789 = vpop.xlane.xlu0 %1788
        %v1790 = vsub.f32 %v1784, %v1789
        %v1791 = vmul.f32 %v1790, 1.442695
        %v1792 = vpow.pop %v1791
        %v1793 = vsel %vm800, %v1792, 0.0
        %1794 = vadd.xlane.f32.xlu0 %v1793
        %v1795 = vpop.xlane.xlu0 %1794
        %v1796 = vrcp.pop %v1795
        %v1797 = vmul.f32 %v1792, %v1796
        %s1798 = scalar_lea.vmem %s441, 16 [#allocation4]
        %1799 = vst.msk [vmem:[%s1798] sm:$0xff] %vm800, %v1797
        %v1801 = vsel %vm800, %v1797, 0
        %1803 = vmatprep.subr.mxu0 0.0
        %1804 = vmatpush1.msra.mxu0 %v1708
        %1805 = vmatprep.subr.mxu0 0.0
        %1806 = vmatpush1.msra.mxu0 0.0
        %1807 = vmatprep.subr.mxu0 0.0
        %1808 = vmatpush1.msra.mxu0 0.0
        %1809 = vmatprep.subr.mxu0 0.0
        %1810 = vmatpush1.msra.mxu0 0.0
        %1811 = vmatprep.subr.mxu0 0.0
        %1812 = vmatpush1.msra.mxu0 0.0
        %1813 = vmatprep.subr.mxu0 0.0
        %1814 = vmatpush1.msra.mxu0 0.0
        %1815 = vmatprep.subr.mxu0 0.0
        %1816 = vmatpush1.msra.mxu0 0.0
        %1817 = vmatprep.subr.mxu0 0.0
        %1818 = vmatpush1.msra.mxu0 0.0
        %1819 = vmatprep.subr.mxu0 0.0
        %1820 = vmatpush1.msra.mxu0 0.0
        %1821 = vmatprep.subr.mxu0 0.0
        %1822 = vmatpush1.msra.mxu0 0.0
        %1823 = vmatprep.subr.mxu0 0.0
        %1824 = vmatpush1.msra.mxu0 0.0
        %1825 = vmatprep.subr.mxu0 0.0
        %1826 = vmatpush1.msra.mxu0 0.0
        %1827 = vmatprep.subr.mxu0 0.0
        %1828 = vmatpush1.msra.mxu0 0.0
        %1829 = vmatprep.subr.mxu0 0.0
        %1830 = vmatpush1.msra.mxu0 0.0
        %1831 = vmatprep.subr.mxu0 0.0
        %1832 = vmatpush1.msra.mxu0 0.0
        %1833 = vmatprep.subr.mxu0 0.0
        %1834 = vmatpush1.msra.mxu0 0.0
        %1835 = vmatprep.subr.mxu0 0.0
        %1836 = vmatpush1.msra.mxu0 0.0
        %1837 = vmatprep.subr.mxu0 0.0
        %1838 = vmatpush1.msra.mxu0 0.0
        %1839 = vmatprep.subr.mxu0 0.0
        %1840 = vmatpush1.msra.mxu0 0.0
        %1841 = vmatprep.subr.mxu0 0.0
        %1842 = vmatpush1.msra.mxu0 0.0
        %1843 = vmatprep.subr.mxu0 0.0
        %1844 = vmatpush1.msra.mxu0 0.0
        %1845 = vmatprep.subr.mxu0 0.0
        %1846 = vmatpush1.msra.mxu0 0.0
        %1847 = vmatprep.subr.mxu0 0.0
        %1848 = vmatpush1.msra.mxu0 0.0
        %1849 = vmatprep.subr.mxu0 0.0
        %1850 = vmatpush1.msra.mxu0 0.0
        %1851 = vmatprep.subr.mxu0 0.0
        %1852 = vmatpush1.msra.mxu0 0.0
        %1853 = vmatprep.subr.mxu0 0.0
        %1854 = vmatpush1.msra.mxu0 0.0
        %1855 = vmatprep.subr.mxu0 0.0
        %1856 = vmatpush1.msra.mxu0 0.0
        %1857 = vmatprep.subr.mxu0 0.0
        %1858 = vmatpush1.msra.mxu0 0.0
        %1859 = vmatprep.subr.mxu0 0.0
        %1860 = vmatpush1.msra.mxu0 0.0
        %1861 = vmatprep.subr.mxu0 0.0
        %1862 = vmatpush1.msra.mxu0 0.0
        %1863 = vmatprep.subr.mxu0 0.0
        %1864 = vmatpush1.msra.mxu0 0.0
        %1865 = vmatprep.subr.mxu0 0.0
        %1866 = vmatpush1.msra.mxu0 0.0
        %1867 = vmatprep.mubr.f32.mxu0 0.0
        %1868 = vmatmul.mubr.f32.gmra.mrb[0].mxu0 %v1801
        %v1869 = vpop.f32.mrb[0].mxu0
        %v1870 = vadd.f32 0.0, %v1869
        %v1871 = vpop.f32.mrb[0].mxu0
        %1872 = vdwg.mxu0
        %s1873 = scalar_lea.vmem %s9, 32
        %v1874 = vld [vmem:[%s1873] sm:$0xff]
        %v1875 = vld [vmem:[%s1873 + $0x8] sm:$0xff]
        %v1877 = vsel %vm723, %v1870, 0
        %1879 = vmatprep.subr.mxu0 0.0
        %1880 = vmatpush1.msra.mxu0 %v1874
        %1881 = vmatprep.subr.mxu0 0.0
        %1882 = vmatpush1.msra.mxu0 %v1875
        %1883 = vmatprep.subr.mxu0 0.0
        %1884 = vmatpush1.msra.mxu0 0.0
        %1885 = vmatprep.subr.mxu0 0.0
        %1886 = vmatpush1.msra.mxu0 0.0
        %1887 = vmatprep.subr.mxu0 0.0
        %1888 = vmatpush1.msra.mxu0 0.0
        %1889 = vmatprep.subr.mxu0 0.0
        %1890 = vmatpush1.msra.mxu0 0.0
        %1891 = vmatprep.subr.mxu0 0.0
        %1892 = vmatpush1.msra.mxu0 0.0
        %1893 = vmatprep.subr.mxu0 0.0
        %1894 = vmatpush1.msra.mxu0 0.0
        %1895 = vmatprep.subr.mxu0 0.0
        %1896 = vmatpush1.msra.mxu0 0.0
        %1897 = vmatprep.subr.mxu0 0.0
        %1898 = vmatpush1.msra.mxu0 0.0
        %1899 = vmatprep.subr.mxu0 0.0
        %1900 = vmatpush1.msra.mxu0 0.0
        %1901 = vmatprep.subr.mxu0 0.0
        %1902 = vmatpush1.msra.mxu0 0.0
        %1903 = vmatprep.subr.mxu0 0.0
        %1904 = vmatpush1.msra.mxu0 0.0
        %1905 = vmatprep.subr.mxu0 0.0
        %1906 = vmatpush1.msra.mxu0 0.0
        %1907 = vmatprep.subr.mxu0 0.0
        %1908 = vmatpush1.msra.mxu0 0.0
        %1909 = vmatprep.subr.mxu0 0.0
        %1910 = vmatpush1.msra.mxu0 0.0
        %1911 = vmatprep.subr.mxu0 0.0
        %1912 = vmatpush1.msra.mxu0 0.0
        %1913 = vmatprep.subr.mxu0 0.0
        %1914 = vmatpush1.msra.mxu0 0.0
        %1915 = vmatprep.subr.mxu0 0.0
        %1916 = vmatpush1.msra.mxu0 0.0
        %1917 = vmatprep.subr.mxu0 0.0
        %1918 = vmatpush1.msra.mxu0 0.0
        %1919 = vmatprep.subr.mxu0 0.0
        %1920 = vmatpush1.msra.mxu0 0.0
        %1921 = vmatprep.subr.mxu0 0.0
        %1922 = vmatpush1.msra.mxu0 0.0
        %1923 = vmatprep.subr.mxu0 0.0
        %1924 = vmatpush1.msra.mxu0 0.0
        %1925 = vmatprep.subr.mxu0 0.0
        %1926 = vmatpush1.msra.mxu0 0.0
        %1927 = vmatprep.subr.mxu0 0.0
        %1928 = vmatpush1.msra.mxu0 0.0
        %1929 = vmatprep.subr.mxu0 0.0
        %1930 = vmatpush1.msra.mxu0 0.0
        %1931 = vmatprep.subr.mxu0 0.0
        %1932 = vmatpush1.msra.mxu0 0.0
        %1933 = vmatprep.subr.mxu0 0.0
        %1934 = vmatpush1.msra.mxu0 0.0
        %1935 = vmatprep.subr.mxu0 0.0
        %1936 = vmatpush1.msra.mxu0 0.0
        %1937 = vmatprep.subr.mxu0 0.0
        %1938 = vmatpush1.msra.mxu0 0.0
        %1939 = vmatprep.subr.mxu0 0.0
        %1940 = vmatpush1.msra.mxu0 0.0
        %1941 = vmatprep.subr.mxu0 0.0
        %1942 = vmatpush1.msra.mxu0 0.0
        %1943 = vmatprep.mubr.f32.mxu0 0.0
        %1944 = vmatmul.mubr.f32.gmra.mrb[0].mxu0 %v1877
        %v1945 = vpop.f32.mrb[0].mxu0
        %v1946 = vadd.f32 0.0, %v1945
        %v1947 = vpop.f32.mrb[0].mxu0
        %1948 = vdwg.mxu0
        %v1949 = vadd.f32 %v1455, %v1946
        %1950 = vst.msk [vmem:[%s434] sm:$0xff] %vm477, %v1949
        %s1951 = sand.u32 %s284, 1
        %s1952 = scalar_lea.sflag [#allocation3], %s1951
        %s1953 = sand.u32 %s284, 1
        %s1954 = smul.addr %s1953, 8
        %s1955 = scalar_lea.vmem [#allocation2], %s1954
        %s1956 = sand.u32 %s310, 1
        %s1957 = scalar_lea.sflag [#allocation5], %s1956
        %s1958 = sand.u32 %s310, 1
        %s1959 = smul.addr %s1958, 24
        %s1960 = scalar_lea.vmem [#allocation4], %s1959
        // Predicated region
        $region65: #{tpu_custom_call.1} parent=63 // pred_check
          %p1961 = pneg %p294
        $region66: #{tpu_custom_call.1} parent=63 // pred_check_branch
          %1963 = sbr.rel (%p1961) target = $region68
        $region67: #{tpu_custom_call.1} parent=63 // pred_region
          %s1965 = ssub.s32 128, 128
          %1966 = vsyncadd %s1952, %s1965
          %s1967 = smul.addr %s30, 128
          %s1968 = scalar_lea.hbm %s11, %s1967
          %s1970 = sshll.u32 %s1955, 4
          %s1971 = int_to_ptr.vmem [resolvable:$true] %s1970
          %1973 = dma.vmem_to_hbm [thread:$0]  %s1971, 128, %s1968, %s1952
        $region68: #{tpu_custom_call.1} parent=63 // pred_fallthru
          _
        // Predicated region
        $region69: #{tpu_custom_call.1} parent=63 // pred_check
          %p1974 = pneg %p320
        $region70: #{tpu_custom_call.1} parent=63 // pred_check_branch
          %1976 = sbr.rel (%p1974) target = $region72
        $region71: #{tpu_custom_call.1} parent=63 // pred_region
          %s1978 = ssub.s32 384, 384
          %1979 = vsyncadd %s1957, %s1978
          %s1980 = smul.addr %s30, 3
          %s1981 = smul.addr %s1980, 128
          %s1982 = scalar_lea.hbm %s12, %s1981
          %s1983 = sshll.u32 %s1960, 4
          %s1984 = int_to_ptr.vmem [resolvable:$true] %s1983
          %1989 = dma.vmem_to_hbm [thread:$0]  %s1984, 384, %s1982, %s1957, 128, 128, 8
        $region72: #{tpu_custom_call.1} parent=63 // pred_fallthru
          _
      $region64: #{tpu_custom_call.1} parent=5 // pred_fallthru
        _
      %p1990 = scmp.le.s32.totalorder 2, %s25
      // Predicated region
      $region73: #{tpu_custom_call.1} parent=5 // pred_check
        %p1991 = pneg %p1990
      $region74: #{tpu_custom_call.1} parent=5 // pred_check_branch
        %1993 = sbr.rel (%p1991) target = $region76
      $region75: #{tpu_custom_call.1} parent=5 // pred_region
        %s1994 = ssub.s32 %s25, 2
        // Predicated region
        $region77: #{tpu_custom_call.1} parent=75 // pred_check
          %p1995 = pneg %p300
        $region78: #{tpu_custom_call.1} parent=75 // pred_check_branch
          %1997 = sbr.rel (%p1995) target = $region80
        $region79: #{tpu_custom_call.1} parent=75 // pred_region
          %s1998 = sand.u32 %s285, 1
          %s1999 = scalar_lea.sflag [#allocation3], %s1998
          %s2000 = sand.u32 %s285, 1
          %s2001 = smul.addr %s2000, 8
          %s2002 = scalar_lea.vmem [#allocation2], %s2001
          %2003 = dma.done %s1999, 128
        $region80: #{tpu_custom_call.1} parent=75 // pred_fallthru
          _
        // Predicated region
        $region81: #{tpu_custom_call.1} parent=75 // pred_check
          %p2004 = pneg %p326
        $region82: #{tpu_custom_call.1} parent=75 // pred_check_branch
          %2006 = sbr.rel (%p2004) target = $region84
        $region83: #{tpu_custom_call.1} parent=75 // pred_region
          %s2007 = sand.u32 %s311, 1
          %s2008 = scalar_lea.sflag [#allocation5], %s2007
          %s2009 = sand.u32 %s311, 1
          %s2010 = smul.addr %s2009, 24
          %s2011 = scalar_lea.vmem [#allocation4], %s2010
          %2012 = dma.done %s2008, 384
        $region84: #{tpu_custom_call.1} parent=75 // pred_fallthru
          _
      $region76: #{tpu_custom_call.1} parent=5 // pred_fallthru
        _
    $region6: #{tpu_custom_call.1} parent=1 // loop_footer
      %s29 = sadd.s32 1, %s25
    $region7: #{tpu_custom_call.1} parent=1 // loop_footer_branch
      %24 = sbr.rel target = $region3
    $region8: #{tpu_custom_call.1} parent=1 // loop_exit
      _
    %2013 = vsyncpa [#allocation3], 1
    %s2014 = scalar_lea.sflag [#allocation3], 1
    %2015 = vsyncpa %s2014, 1
    %2016 = vsyncpa [#allocation5], 1
    %s2017 = scalar_lea.sflag [#allocation5], 1
    %2018 = vsyncpa %s2017, 1

</llo_original>
